<compile_context>
chip_gen: v6e
topology: v6e:2x2x1
jax: 0.10.0
libtpu: 0.0.40
codegen_flags: <defaults>
</compile_context>

<pallas_src>
import functools
import math

import jax
import jax.numpy as jnp
from jax import lax
from jax.experimental import pallas as pl
from jax.experimental.pallas import tpu as pltpu


def _round_up(x, m):
    return ((x + m - 1) // m) * m


def _vmem_budget():
    """(physical per-core VMEM bytes, scoped limit we request from Mosaic)."""
    physical = None
    try:
        physical = int(pltpu.get_tpu_info().vmem_capacity_bytes)
    except Exception:
        physical = None
    if not physical:
        physical = 64 * 1024 * 1024          # conservative: v7x per-TC VMEM
    # Leave ~25% headroom for compiler-internal scratch: ~48 MiB on v7x,
    # ~96 MiB on v5e/v6e (instead of the previous hard 64 MiB cap).
    return physical, (physical * 3) // 4


def _pick_batch_block(B, N, L, T, C_in, E, Lp, budget_bytes, row_cap):
    """VMEM-budget-driven batch block with >=2 grid steps whenever B >= 2."""
    # Grid-invariant bytes: folded bf16 weights + f32 biases (single-buffered),
    # plus a couple MiB of slack for semaphores / descriptors.
    fixed = 2 * (C_in * E + T * 2 * E + E * E) + 4 * (4 * E) + (2 << 20)
    # Per-batch-element, per-step bytes: double-buffered pipeline blocks ...
    per_b = 2 * (N * C_in * 2)               # x block  (bf16)
    per_b += 2 * (L * T * 2)                 # h block  (bf16)
    per_b += 2 * (E * N * 4)                 # out block (f32)
    per_b += 2 * (N * Lp * 4)                # attn block (f32)
    # ... plus in-kernel f32 intermediates (qp, kvp, scores/p/attn, ctx, out)
    #     with a 1.5x allowance for relayout copies.
    per_b += int(1.5 * 4 * (N * E + L * 2 * E + 3 * N * L + 2 * N * E))
    bb = max(1, (budget_bytes - fixed) // max(per_b, 1))
    bb = min(bb, max(1, row_cap // max(N, 1)))   # MXU-row cap (tighter on v7x)
    bb = min(bb, B)
    if B >= 2:
        # >=2 grid steps: gives the auto-pipeline a prologue to hide DMAs
        # behind and lets v7x shard the "parallel" batch axis over its 2 TCs.
        bb = min(bb, max(1, B // 2))
    return max(1, int(bb))


def _self_attn1_kernel(x_ref, h_ref,
                       wq_ref, bq_ref,     # folded query path : (C_in, E) bf16, (1, E) f32
                       wkv_ref, bkv_ref,   # folded fused K/V  : (T, 2E)  bf16, (1, 2E) f32
                       wo_ref, bo_ref,     # MHA out_proj      : (E, E)   bf16, (1, E) f32
                       out_ref, attn_ref, *, transpose_out):
    f32 = jnp.float32
    bf16 = jnp.bfloat16
    bb, N, Cin = x_ref.shape
    _, L, T = h_ref.shape
    E = wo_ref.shape[0]
    Lp = attn_ref.shape[-1]

    # Batch-flattened projections: fill the MXU with bb*N / bb*L rows at once.
    xf = x_ref[...].reshape(bb * N, Cin)                                          # bf16
    hf = h_ref[...].reshape(bb * L, T)                                            # bf16

    # Q path: query_conv -> linear_proj_1 -> MHA Wq (folded, pre-scaled 1/sqrt(E)).
    qp = jnp.dot(xf, wq_ref[...], preferred_element_type=f32) + bq_ref[...]       # (bb*N, E)
    # K/V path: linear_proj_3 -> MHA Wk / Wv, folded and fused into one matmul.
    kvp = jnp.dot(hf, wkv_ref[...], preferred_element_type=f32) + bkv_ref[...]    # (bb*L, 2E)

    qb = qp.reshape(bb, N, E).astype(bf16)
    kvb = kvp.reshape(bb, L, 2 * E)
    kb = kvb[:, :, :E].astype(bf16)
    vb = kvb[:, :, E:].astype(bf16)

    # Attention scores: contract on E, batch over bb.
    scores = lax.dot_general(qb, kb,
                             dimension_numbers=(((2,), (2,)), ((0,), (0,))),
                             preferred_element_type=f32)                          # (bb, N, L)

    # Softmax in f32 with an *exact* reciprocal (the attention map is exported).
    m = jnp.max(scores, axis=-1, keepdims=True)
    p = jnp.exp(scores - m)
    denom = jnp.sum(p, axis=-1, keepdims=True)
    attn = p * (1.0 / denom)                                                      # (bb, N, L)

    ctx = lax.dot_general(attn.astype(bf16), vb,
                          dimension_numbers=(((2,), (1,)), ((0,), (0,))),
                          preferred_element_type=f32)                             # (bb, N, E)

    out = jnp.dot(ctx.reshape(bb * N, E).astype(bf16), wo_ref[...],
                  preferred_element_type=f32) + bo_ref[...]                       # (bb*N, E)
    out3 = out.reshape(bb, N, E)

    if transpose_out:
        # Emit (bb, E, N) directly: the XLU transpose is hidden under MXU work
        # and removes a full f32 HBM read+write transpose in the wrapper.
        out_ref[...] = jnp.transpose(out3, (0, 2, 1))
    else:
        out_ref[...] = out3

    if Lp == L:
        attn_ref[...] = attn                       # unpadded store (masked vst)
    else:
        attn_ref[...] = jnp.concatenate(           # lane-dense store (pad <= 2x)
            [attn, jnp.zeros((bb, N, Lp - L), f32)], axis=-1)


def _fold_params(params):
    """Fold the chained linears (host side, f32), cast matmul weights to bf16."""
    f32 = jnp.float32
    E = params["w1"].shape[1]
    scale = 1.0 / math.sqrt(float(E))
    # ((x @ Wqc + bqc) @ W1 + b1) @ Wq + bq  ==  x @ Wq_eff + bq_eff
    wq_eff = (params["wqc"] @ params["w1"] @ params["wq"]) * scale
    bq_eff = ((params["bqc"] @ params["w1"] + params["b1"]) @ params["wq"]
              + params["bq"]) * scale
    # (h @ W3 + b3) @ W{k,v} + b{k,v}  -> fused [K | V]
    wk_eff = params["w3"] @ params["wk"]
    bk_eff = params["b3"] @ params["wk"] + params["bk"]
    wv_eff = params["w3"] @ params["wv"]
    bv_eff = params["b3"] @ params["wv"] + params["bv"]
    wkv_eff = jnp.concatenate([wk_eff, wv_eff], axis=1)
    bkv_eff = jnp.concatenate([bk_eff, bv_eff], axis=1)
    return (wq_eff.astype(jnp.bfloat16), bq_eff.astype(f32),
            wkv_eff.astype(jnp.bfloat16), bkv_eff.astype(f32),
            params["wo"].astype(jnp.bfloat16), params["bo"].astype(f32))


def _weight_spec(arr, single_buffer):
    r, c = arr.shape
    if single_buffer:
        # Constant index_map -> one buffer is enough; saves VMEM (v7x headroom).
        return pl.BlockSpec((r, c), lambda g: (0, 0), pipeline_mode=pl.Buffered(1))
    return pl.BlockSpec((r, c), lambda g: (0, 0))


def self_attn1_forward(last_hidden, last_conv, params):
    """last_hidden: (B, L, T) f32, last_conv: (B, C_in, W, H) f32."""
    B, C_in, W, H = last_conv.shape
    N = W * H
    _, L, T = last_hidden.shape
    E = params["w1"].shape[1]

    # NCHW -> (B, N, C_in) (torch .view(B, Cq, W*H).permute(0, 2, 1)); bf16 for DMA/MXU.
    # TODO(synk): if the upstream conv can emit NHWC, this relayout disappears.
    x = jnp.transpose(last_conv.reshape(B, C_in, N), (0, 2, 1)).astype(jnp.bfloat16)
    h = last_hidden.astype(jnp.bfloat16)

    weights = _fold_params(params)

    # Conditional attention lane padding: only pad L to 128 if it costs <= 2x
    # extra writeback; otherwise store unpadded (masked stores beat 16x traffic).
    Lp_pad = _round_up(L, 128)
    Lp = Lp_pad if Lp_pad <= 2 * L else L

    physical_vmem, vmem_limit = _vmem_budget()
    row_cap = 1024 if physical_vmem <= 64 * 1024 * 1024 else 2048
    bb = _pick_batch_block(B, N, L, T, C_in, E, Lp, vmem_limit, row_cap)

    grid_steps = -(-B // bb)
    B_pad = grid_steps * bb
    if B_pad != B:                       # awkward B: pad batch, slice back below
        x = jnp.pad(x, ((0, B_pad - B), (0, 0), (0, 0)))
        h = jnp.pad(h, ((0, B_pad - B), (0, 0), (0, 0)))

    def run(fast):
        in_specs = [
            pl.BlockSpec((bb, N, C_in), lambda g: (g, 0, 0)),
            pl.BlockSpec((bb, L, T), lambda g: (g, 0, 0)),
        ] + [_weight_spec(w, single_buffer=fast) for w in weights]

        if fast:
            out_shape0 = jax.ShapeDtypeStruct((B_pad, E, N), jnp.float32)
            out_spec0 = pl.BlockSpec((bb, E, N), lambda g: (g, 0, 0))
        else:
            out_shape0 = jax.ShapeDtypeStruct((B_pad, N, E), jnp.float32)
            out_spec0 = pl.BlockSpec((bb, N, E), lambda g: (g, 0, 0))

        out_specs = (out_spec0,
                     pl.BlockSpec((bb, N, Lp), lambda g: (g, 0, 0)))
        kern = functools.partial(_self_attn1_kernel, transpose_out=fast)

        return pl.pallas_call(
            kern,
            out_shape=(out_shape0,
                       jax.ShapeDtypeStruct((B_pad, N, Lp), jnp.float32)),
            grid_spec=pltpu.PrefetchScalarGridSpec(
                num_scalar_prefetch=0,
                grid=(grid_steps,),
                in_specs=in_specs,
                out_specs=out_specs,
            ),
            compiler_params=pltpu.CompilerParams(
                dimension_semantics=("parallel",),
                vmem_limit_bytes=int(vmem_limit),
            ),
        )(x, h, *weights)

    # Prefer the optimized configuration; fall back if this JAX/Mosaic build
    # rejects single-buffered BlockSpecs or the in-kernel output transpose.
    try:
        out, attn_padded = run(fast=True)
        out = jax.block_until_ready(out)
        fast = True
    except Exception:
        out, attn_padded = run(fast=False)
        out = jax.block_until_ready(out)
        fast = False

    if fast:
        # Kernel already emitted (B, E, N); just reshape (view) to NCHW.
        out_nchw = out[:B].reshape(B, E, W, H)
    else:
        # torch: out.permute(0, 2, 1).view(B, C, W, H)
        out_nchw = jnp.transpose(out[:B], (0, 2, 1)).reshape(B, E, W, H)
    attn = attn_padded[:B, :, :L]
    return out_nchw, attn


def _reference_forward(last_hidden, last_conv, params):
    """Pure-JAX f32 reference on the un-folded params."""
    B, C_in, W, H = last_conv.shape
    N = W * H
    E = params["w1"].shape[1]
    x = jnp.transpose(last_conv.reshape(B, C_in, N), (0, 2, 1))
    q0 = x @ params["wqc"] + params["bqc"]
    q1 = q0 @ params["w1"] + params["b1"]
    kv = last_hidden @ params["w3"] + params["b3"]
    qp = q1 @ params["wq"] + params["bq"]
    kp = kv @ params["wk"] + params["bk"]
    vp = kv @ params["wv"] + params["bv"]
    scores = jnp.einsum("bnd,bld->bnl", qp, kp) / math.sqrt(E)
    attn = jax.nn.softmax(scores, axis=-1)
    ctx = jnp.einsum("bnl,bld->bnd", attn, vp)
    out = ctx @ params["wo"] + params["bo"]
    return jnp.transpose(out, (0, 2, 1)).reshape(B, E, W, H), attn


def make_params(key, in_dim, txt_feat_size, fixed_feat_size):
    cq = in_dim // 8
    E = fixed_feat_size
    T = txt_feat_size
    ks = jax.random.split(key, 14)
    s = 0.05
    return {
        # query_conv weight is (Cq, C_in, 1, 1) in torch -> stored transposed (C_in, Cq)
        "wqc": jax.random.normal(ks[0], (in_dim, cq), jnp.float32) * s,
        "bqc": jax.random.normal(ks[1], (1, cq), jnp.float32) * s,
        # linear_proj_1: torch (E, Cq) -> stored (Cq, E)
        "w1": jax.random.normal(ks[2], (cq, E), jnp.float32) * s,
        "b1": jax.random.normal(ks[3], (1, E), jnp.float32) * s,
        # linear_proj_3: torch (E, T) -> stored (T, E)
        "w3": jax.random.normal(ks[4], (T, E), jnp.float32) * s,
        "b3": jax.random.normal(ks[5], (1, E), jnp.float32) * s,
        # MHA in_proj (split of (3E, E)) -> each stored (E, E) transposed
        "wq": jax.random.normal(ks[6], (E, E), jnp.float32) * s,
        "bq": jax.random.normal(ks[7], (1, E), jnp.float32) * s,
        "wk": jax.random.normal(ks[8], (E, E), jnp.float32) * s,
        "bk": jax.random.normal(ks[9], (1, E), jnp.float32) * s,
        "wv": jax.random.normal(ks[10], (E, E), jnp.float32) * s,
        "bv": jax.random.normal(ks[11], (1, E), jnp.float32) * s,
        # MHA out_proj: torch (E, E) -> stored transposed
        "wo": jax.random.normal(ks[12], (E, E), jnp.float32) * s,
        "bo": jax.random.normal(ks[13], (1, E), jnp.float32) * s,
    }


if __name__ == "__main__":
    # Small, self-consistent shapes (scaled-down analog of in_dim=2048, E=768).
    B = 2
    in_dim = 64          # C_in of last_conv; query channels = in_dim // 8 = 8
    W = H = 4            # N = W*H = 16
    L = 8                # text sequence length
    txt_feat_size = 24
    fixed_feat_size = 32 # E (plays the role of the hard-coded C = 768)

    key = jax.random.PRNGKey(0)
    k_conv, k_hid, k_par = jax.random.split(key, 3)
    last_conv = jax.random.normal(k_conv, (B, in_dim, W, H), jnp.float32)
    last_hidden = jax.random.normal(k_hid, (B, L, txt_feat_size), jnp.float32)
    params = make_params(k_par, in_dim, txt_feat_size, fixed_feat_size)

    out, attn = self_attn1_forward(last_hidden, last_conv, params)
    out = jax.block_until_ready(out)
    attn = jax.block_until_ready(attn)

    ref_out, ref_attn = _reference_forward(last_hidden, last_conv, params)
    assert out.shape == (B, fixed_feat_size, W, H)
    assert attn.shape == (B, W * H, L)
    # bf16 MXU inputs -> looser tolerance than a pure-f32 path (intentional).
    assert jnp.allclose(out, ref_out, rtol=5e-2, atol=5e-3), \
        float(jnp.max(jnp.abs(out - ref_out)))
    assert jnp.allclose(attn, ref_attn, rtol=5e-2, atol=5e-3), \
        float(jnp.max(jnp.abs(attn - ref_attn)))

    print("KERNEL_OK")
</pallas_src>

<mosaic_0001>
module attributes {stable_mosaic.version = 11 : i64} {
  func.func @_self_attn1_kernel(%arg0: i32, %arg1: memref<1x16x64xbf16, #tpu.memory_space<vmem>>, %arg2: memref<1x8x24xbf16, #tpu.memory_space<vmem>>, %arg3: memref<64x32xbf16, #tpu.memory_space<vmem>>, %arg4: memref<1x32xf32, #tpu.memory_space<vmem>>, %arg5: memref<24x64xbf16, #tpu.memory_space<vmem>>, %arg6: memref<1x64xf32, #tpu.memory_space<vmem>>, %arg7: memref<32x32xbf16, #tpu.memory_space<vmem>>, %arg8: memref<1x32xf32, #tpu.memory_space<vmem>>, %arg9: memref<1x32x16xf32, #tpu.memory_space<vmem>>, %arg10: memref<1x16x8xf32, #tpu.memory_space<vmem>>) attributes {dimension_semantics = [#tpu.dimension_semantics<parallel>], iteration_bounds = array<i64: 2>, scalar_prefetch = 0 : i64, scratch_operands = 0 : i64, tpu.core_type = #tpu.core_type<tc>, window_params = [{transform_indices = @transform_0, window_bounds = array<i64: 1, 16, 64>}, {transform_indices = @transform_1, window_bounds = array<i64: 1, 8, 24>}, {pipeline_mode = #tpu.pipeline_mode<synchronous>, transform_indices = @transform_2, window_bounds = array<i64: 64, 32>}, {pipeline_mode = #tpu.pipeline_mode<synchronous>, transform_indices = @transform_3, window_bounds = array<i64: 1, 32>}, {pipeline_mode = #tpu.pipeline_mode<synchronous>, transform_indices = @transform_4, window_bounds = array<i64: 24, 64>}, {pipeline_mode = #tpu.pipeline_mode<synchronous>, transform_indices = @transform_5, window_bounds = array<i64: 1, 64>}, {pipeline_mode = #tpu.pipeline_mode<synchronous>, transform_indices = @transform_6, window_bounds = array<i64: 32, 32>}, {pipeline_mode = #tpu.pipeline_mode<synchronous>, transform_indices = @transform_7, window_bounds = array<i64: 1, 32>}, {transform_indices = @transform_8, window_bounds = array<i64: 1, 32, 16>}, {transform_indices = @transform_9, window_bounds = array<i64: 1, 16, 8>}]} {
    %c0 = arith.constant 0 : index
    %c0_0 = arith.constant 0 : index
    %c0_1 = arith.constant 0 : index
    %0 = vector.load %arg1[%c0, %c0_0, %c0_1] : memref<1x16x64xbf16, #tpu.memory_space<vmem>>, vector<1x16x64xbf16>
    %1 = vector.shape_cast %0 : vector<1x16x64xbf16> to vector<16x64xbf16>
    %c0_2 = arith.constant 0 : index
    %c0_3 = arith.constant 0 : index
    %c0_4 = arith.constant 0 : index
    %2 = vector.load %arg2[%c0_2, %c0_3, %c0_4] : memref<1x8x24xbf16, #tpu.memory_space<vmem>>, vector<1x8x24xbf16>
    %3 = vector.shape_cast %2 : vector<1x8x24xbf16> to vector<8x24xbf16>
    %c0_5 = arith.constant 0 : index
    %c0_6 = arith.constant 0 : index
    %4 = vector.load %arg3[%c0_5, %c0_6] : memref<64x32xbf16, #tpu.memory_space<vmem>>, vector<64x32xbf16>
    %cst = arith.constant dense<0.000000e+00> : vector<16x32xf32>
    %5 = tpu.matmul %1, %4, %cst {dimension_numbers = #tpu.dot_dimension_numbers<[1], [0], [0], [1], [0, 0, 1, 1], [], []>} : vector<16x64xbf16>, vector<64x32xbf16>, vector<16x32xf32> -> vector<16x32xf32>
    %c0_7 = arith.constant 0 : index
    %c0_8 = arith.constant 0 : index
    %6 = vector.load %arg4[%c0_7, %c0_8] : memref<1x32xf32, #tpu.memory_space<vmem>>, vector<1x32xf32>
    %7 = vector.broadcast %6 : vector<1x32xf32> to vector<16x32xf32>
    %8 = arith.addf %5, %7 : vector<16x32xf32>
    %c0_9 = arith.constant 0 : index
    %c0_10 = arith.constant 0 : index
    %9 = vector.load %arg5[%c0_9, %c0_10] : memref<24x64xbf16, #tpu.memory_space<vmem>>, vector<24x64xbf16>
    %cst_11 = arith.constant dense<0.000000e+00> : vector<8x64xf32>
    %10 = tpu.matmul %3, %9, %cst_11 {dimension_numbers = #tpu.dot_dimension_numbers<[1], [0], [0], [1], [0, 0, 1, 1], [], []>} : vector<8x24xbf16>, vector<24x64xbf16>, vector<8x64xf32> -> vector<8x64xf32>
    %c0_12 = arith.constant 0 : index
    %c0_13 = arith.constant 0 : index
    %11 = vector.load %arg6[%c0_12, %c0_13] : memref<1x64xf32, #tpu.memory_space<vmem>>, vector<1x64xf32>
    %12 = vector.broadcast %11 : vector<1x64xf32> to vector<8x64xf32>
    %13 = arith.addf %10, %12 : vector<8x64xf32>
    %14 = vector.shape_cast %8 : vector<16x32xf32> to vector<1x16x32xf32>
    %15 = arith.truncf %14 : vector<1x16x32xf32> to vector<1x16x32xbf16>
    %16 = vector.shape_cast %13 : vector<8x64xf32> to vector<1x8x64xf32>
    %17 = vector.extract_strided_slice %16 {offsets = [0, 0, 0], sizes = [1, 8, 32], strides = [1, 1, 1]} : vector<1x8x64xf32> to vector<1x8x32xf32>
    %18 = arith.truncf %17 : vector<1x8x32xf32> to vector<1x8x32xbf16>
    %19 = vector.extract_strided_slice %16 {offsets = [0, 0, 32], sizes = [1, 8, 32], strides = [1, 1, 1]} : vector<1x8x64xf32> to vector<1x8x32xf32>
    %20 = arith.truncf %19 : vector<1x8x32xf32> to vector<1x8x32xbf16>
    %cst_14 = arith.constant dense<0.000000e+00> : vector<1x16x8xf32>
    %21 = tpu.matmul %15, %18, %cst_14 {dimension_numbers = #tpu.dot_dimension_numbers<[2], [2], [1], [1], [0, 0, 0, 1, 1, 1], [0], [0]>} : vector<1x16x32xbf16>, vector<1x8x32xbf16>, vector<1x16x8xf32> -> vector<1x16x8xf32>
    %cst_15 = arith.constant dense<0xFF800000> : vector<1x16xf32>
    %22 = vector.multi_reduction <maximumf>, %21, %cst_15 [2] : vector<1x16x8xf32> to vector<1x16xf32>
    %23 = vector.shape_cast %22 : vector<1x16xf32> to vector<1x16x1xf32>
    %24 = vector.broadcast %23 : vector<1x16x1xf32> to vector<1x16x8xf32>
    %25 = arith.subf %21, %24 : vector<1x16x8xf32>
    %26 = math.exp %25 : vector<1x16x8xf32>
    %cst_16 = arith.constant dense<0.000000e+00> : vector<1x16xf32>
    %27 = vector.multi_reduction <add>, %26, %cst_16 [2] : vector<1x16x8xf32> to vector<1x16xf32>
    %28 = vector.shape_cast %27 : vector<1x16xf32> to vector<1x16x1xf32>
    %cst_17 = arith.constant 1.000000e+00 : f32
    %29 = vector.broadcast %cst_17 : f32 to vector<1x16x1xf32>
    %30 = arith.divf %29, %28 : vector<1x16x1xf32>
    %31 = vector.broadcast %30 : vector<1x16x1xf32> to vector<1x16x8xf32>
    %32 = arith.mulf %26, %31 : vector<1x16x8xf32>
    %33 = arith.truncf %32 : vector<1x16x8xf32> to vector<1x16x8xbf16>
    %cst_18 = arith.constant dense<0.000000e+00> : vector<1x16x32xf32>
    %34 = tpu.matmul %33, %20, %cst_18 {dimension_numbers = #tpu.dot_dimension_numbers<[2], [1], [1], [2], [0, 0, 0, 1, 1, 2], [0], [0]>} : vector<1x16x8xbf16>, vector<1x8x32xbf16>, vector<1x16x32xf32> -> vector<1x16x32xf32>
    %35 = vector.shape_cast %34 : vector<1x16x32xf32> to vector<16x32xf32>
    %36 = arith.truncf %35 : vector<16x32xf32> to vector<16x32xbf16>
    %c0_19 = arith.constant 0 : index
    %c0_20 = arith.constant 0 : index
    %37 = vector.load %arg7[%c0_19, %c0_20] : memref<32x32xbf16, #tpu.memory_space<vmem>>, vector<32x32xbf16>
    %cst_21 = arith.constant dense<0.000000e+00> : vector<16x32xf32>
    %38 = tpu.matmul %36, %37, %cst_21 {dimension_numbers = #tpu.dot_dimension_numbers<[1], [0], [0], [1], [0, 0, 1, 1], [], []>} : vector<16x32xbf16>, vector<32x32xbf16>, vector<16x32xf32> -> vector<16x32xf32>
    %c0_22 = arith.constant 0 : index
    %c0_23 = arith.constant 0 : index
    %39 = vector.load %arg8[%c0_22, %c0_23] : memref<1x32xf32, #tpu.memory_space<vmem>>, vector<1x32xf32>
    %40 = vector.broadcast %39 : vector<1x32xf32> to vector<16x32xf32>
    %41 = arith.addf %38, %40 : vector<16x32xf32>
    %42 = vector.shape_cast %41 : vector<16x32xf32> to vector<1x16x32xf32>
    %43 = tpu.transpose %42, [0, 2, 1] : vector<1x16x32xf32> -> vector<1x32x16xf32>
    %c0_24 = arith.constant 0 : index
    %c0_25 = arith.constant 0 : index
    %c0_26 = arith.constant 0 : index
    %44 = vector.load %arg9[%c0_24, %c0_25, %c0_26] : memref<1x32x16xf32, #tpu.memory_space<vmem>>, vector<1x32x16xf32>
    tpu.vector_store %arg9[%c0_24, %c0_25, %c0_26], %43 {strides = array<i32>} : memref<1x32x16xf32, #tpu.memory_space<vmem>>, vector<1x32x16xf32>,
    %c0_27 = arith.constant 0 : index
    %c0_28 = arith.constant 0 : index
    %c0_29 = arith.constant 0 : index
    %45 = vector.load %arg10[%c0_27, %c0_28, %c0_29] : memref<1x16x8xf32, #tpu.memory_space<vmem>>, vector<1x16x8xf32>
    tpu.vector_store %arg10[%c0_27, %c0_28, %c0_29], %32 {strides = array<i32>} : memref<1x16x8xf32, #tpu.memory_space<vmem>>, vector<1x16x8xf32>,
    return
  }
  func.func @transform_0(%arg0: i32) -> (i32, i32, i32) {
    %c0_i32 = arith.constant 0 : i32
    %c0_i32_0 = arith.constant 0 : i32
    %c0_i32_1 = arith.constant 0 : i32
    return %arg0, %c0_i32, %c0_i32_0 : i32, i32, i32
  }
  func.func @transform_1(%arg0: i32) -> (i32, i32, i32) {
    %c0_i32 = arith.constant 0 : i32
    %c0_i32_0 = arith.constant 0 : i32
    %c0_i32_1 = arith.constant 0 : i32
    return %arg0, %c0_i32, %c0_i32_0 : i32, i32, i32
  }
  func.func @transform_2(%arg0: i32) -> (i32, i32) {
    %c0_i32 = arith.constant 0 : i32
    %c0_i32_0 = arith.constant 0 : i32
    %c0_i32_1 = arith.constant 0 : i32
    return %c0_i32, %c0_i32_0 : i32, i32
  }
  func.func @transform_3(%arg0: i32) -> (i32, i32) {
    %c0_i32 = arith.constant 0 : i32
    %c0_i32_0 = arith.constant 0 : i32
    %c0_i32_1 = arith.constant 0 : i32
    return %c0_i32, %c0_i32_0 : i32, i32
  }
  func.func @transform_4(%arg0: i32) -> (i32, i32) {
    %c0_i32 = arith.constant 0 : i32
    %c0_i32_0 = arith.constant 0 : i32
    %c0_i32_1 = arith.constant 0 : i32
    return %c0_i32, %c0_i32_0 : i32, i32
  }
  func.func @transform_5(%arg0: i32) -> (i32, i32) {
    %c0_i32 = arith.constant 0 : i32
    %c0_i32_0 = arith.constant 0 : i32
    %c0_i32_1 = arith.constant 0 : i32
    return %c0_i32, %c0_i32_0 : i32, i32
  }
  func.func @transform_6(%arg0: i32) -> (i32, i32) {
    %c0_i32 = arith.constant 0 : i32
    %c0_i32_0 = arith.constant 0 : i32
    %c0_i32_1 = arith.constant 0 : i32
    return %c0_i32, %c0_i32_0 : i32, i32
  }
  func.func @transform_7(%arg0: i32) -> (i32, i32) {
    %c0_i32 = arith.constant 0 : i32
    %c0_i32_0 = arith.constant 0 : i32
    %c0_i32_1 = arith.constant 0 : i32
    return %c0_i32, %c0_i32_0 : i32, i32
  }
  func.func @transform_8(%arg0: i32) -> (i32, i32, i32) {
    %c0_i32 = arith.constant 0 : i32
    %c0_i32_0 = arith.constant 0 : i32
    %c0_i32_1 = arith.constant 0 : i32
    return %arg0, %c0_i32, %c0_i32_0 : i32, i32, i32
  }
  func.func @transform_9(%arg0: i32) -> (i32, i32, i32) {
    %c0_i32 = arith.constant 0 : i32
    %c0_i32_0 = arith.constant 0 : i32
    %c0_i32_1 = arith.constant 0 : i32
    return %arg0, %c0_i32, %c0_i32_0 : i32, i32, i32
  }
}

module attributes {stable_mosaic.version = 11 : i64} {
  func.func @_self_attn1_kernel(%arg0: i32, %arg1: memref<1x16x64xbf16, #tpu.memory_space<vmem>>, %arg2: memref<1x8x24xbf16, #tpu.memory_space<vmem>>, %arg3: memref<64x32xbf16, #tpu.memory_space<vmem>>, %arg4: memref<1x32xf32, #tpu.memory_space<vmem>>, %arg5: memref<24x64xbf16, #tpu.memory_space<vmem>>, %arg6: memref<1x64xf32, #tpu.memory_space<vmem>>, %arg7: memref<32x32xbf16, #tpu.memory_space<vmem>>, %arg8: memref<1x32xf32, #tpu.memory_space<vmem>>, %arg9: memref<1x16x32xf32, #tpu.memory_space<vmem>>, %arg10: memref<1x16x8xf32, #tpu.memory_space<vmem>>) attributes {dimension_semantics = [#tpu.dimension_semantics<parallel>], iteration_bounds = array<i64: 2>, scalar_prefetch = 0 : i64, scratch_operands = 0 : i64, tpu.core_type = #tpu.core_type<tc>, window_params = [{transform_indices = @transform_0, window_bounds = array<i64: 1, 16, 64>}, {transform_indices = @transform_1, window_bounds = array<i64: 1, 8, 24>}, {pipeline_mode = #tpu.pipeline_mode<synchronous>, transform_indices = @transform_2, window_bounds = array<i64: 64, 32>}, {pipeline_mode = #tpu.pipeline_mode<synchronous>, transform_indices = @transform_3, window_bounds = array<i64: 1, 32>}, {pipeline_mode = #tpu.pipeline_mode<synchronous>, transform_indices = @transform_4, window_bounds = array<i64: 24, 64>}, {pipeline_mode = #tpu.pipeline_mode<synchronous>, transform_indices = @transform_5, window_bounds = array<i64: 1, 64>}, {pipeline_mode = #tpu.pipeline_mode<synchronous>, transform_indices = @transform_6, window_bounds = array<i64: 32, 32>}, {pipeline_mode = #tpu.pipeline_mode<synchronous>, transform_indices = @transform_7, window_bounds = array<i64: 1, 32>}, {transform_indices = @transform_8, window_bounds = array<i64: 1, 16, 32>}, {transform_indices = @transform_9, window_bounds = array<i64: 1, 16, 8>}]} {
    %c0 = arith.constant 0 : index
    %c0_0 = arith.constant 0 : index
    %c0_1 = arith.constant 0 : index
    %0 = vector.load %arg1[%c0, %c0_0, %c0_1] : memref<1x16x64xbf16, #tpu.memory_space<vmem>>, vector<1x16x64xbf16>
    %1 = vector.shape_cast %0 : vector<1x16x64xbf16> to vector<16x64xbf16>
    %c0_2 = arith.constant 0 : index
    %c0_3 = arith.constant 0 : index
    %c0_4 = arith.constant 0 : index
    %2 = vector.load %arg2[%c0_2, %c0_3, %c0_4] : memref<1x8x24xbf16, #tpu.memory_space<vmem>>, vector<1x8x24xbf16>
    %3 = vector.shape_cast %2 : vector<1x8x24xbf16> to vector<8x24xbf16>
    %c0_5 = arith.constant 0 : index
    %c0_6 = arith.constant 0 : index
    %4 = vector.load %arg3[%c0_5, %c0_6] : memref<64x32xbf16, #tpu.memory_space<vmem>>, vector<64x32xbf16>
    %cst = arith.constant dense<0.000000e+00> : vector<16x32xf32>
    %5 = tpu.matmul %1, %4, %cst {dimension_numbers = #tpu.dot_dimension_numbers<[1], [0], [0], [1], [0, 0, 1, 1], [], []>} : vector<16x64xbf16>, vector<64x32xbf16>, vector<16x32xf32> -> vector<16x32xf32>
    %c0_7 = arith.constant 0 : index
    %c0_8 = arith.constant 0 : index
    %6 = vector.load %arg4[%c0_7, %c0_8] : memref<1x32xf32, #tpu.memory_space<vmem>>, vector<1x32xf32>
    %7 = vector.broadcast %6 : vector<1x32xf32> to vector<16x32xf32>
    %8 = arith.addf %5, %7 : vector<16x32xf32>
    %c0_9 = arith.constant 0 : index
    %c0_10 = arith.constant 0 : index
    %9 = vector.load %arg5[%c0_9, %c0_10] : memref<24x64xbf16, #tpu.memory_space<vmem>>, vector<24x64xbf16>
    %cst_11 = arith.constant dense<0.000000e+00> : vector<8x64xf32>
    %10 = tpu.matmul %3, %9, %cst_11 {dimension_numbers = #tpu.dot_dimension_numbers<[1], [0], [0], [1], [0, 0, 1, 1], [], []>} : vector<8x24xbf16>, vector<24x64xbf16>, vector<8x64xf32> -> vector<8x64xf32>
    %c0_12 = arith.constant 0 : index
    %c0_13 = arith.constant 0 : index
    %11 = vector.load %arg6[%c0_12, %c0_13] : memref<1x64xf32, #tpu.memory_space<vmem>>, vector<1x64xf32>
    %12 = vector.broadcast %11 : vector<1x64xf32> to vector<8x64xf32>
    %13 = arith.addf %10, %12 : vector<8x64xf32>
    %14 = vector.shape_cast %8 : vector<16x32xf32> to vector<1x16x32xf32>
    %15 = arith.truncf %14 : vector<1x16x32xf32> to vector<1x16x32xbf16>
    %16 = vector.shape_cast %13 : vector<8x64xf32> to vector<1x8x64xf32>
    %17 = vector.extract_strided_slice %16 {offsets = [0, 0, 0], sizes = [1, 8, 32], strides = [1, 1, 1]} : vector<1x8x64xf32> to vector<1x8x32xf32>
    %18 = arith.truncf %17 : vector<1x8x32xf32> to vector<1x8x32xbf16>
    %19 = vector.extract_strided_slice %16 {offsets = [0, 0, 32], sizes = [1, 8, 32], strides = [1, 1, 1]} : vector<1x8x64xf32> to vector<1x8x32xf32>
    %20 = arith.truncf %19 : vector<1x8x32xf32> to vector<1x8x32xbf16>
    %cst_14 = arith.constant dense<0.000000e+00> : vector<1x16x8xf32>
    %21 = tpu.matmul %15, %18, %cst_14 {dimension_numbers = #tpu.dot_dimension_numbers<[2], [2], [1], [1], [0, 0, 0, 1, 1, 1], [0], [0]>} : vector<1x16x32xbf16>, vector<1x8x32xbf16>, vector<1x16x8xf32> -> vector<1x16x8xf32>
    %cst_15 = arith.constant dense<0xFF800000> : vector<1x16xf32>
    %22 = vector.multi_reduction <maximumf>, %21, %cst_15 [2] : vector<1x16x8xf32> to vector<1x16xf32>
    %23 = vector.shape_cast %22 : vector<1x16xf32> to vector<1x16x1xf32>
    %24 = vector.broadcast %23 : vector<1x16x1xf32> to vector<1x16x8xf32>
    %25 = arith.subf %21, %24 : vector<1x16x8xf32>
    %26 = math.exp %25 : vector<1x16x8xf32>
    %cst_16 = arith.constant dense<0.000000e+00> : vector<1x16xf32>
    %27 = vector.multi_reduction <add>, %26, %cst_16 [2] : vector<1x16x8xf32> to vector<1x16xf32>
    %28 = vector.shape_cast %27 : vector<1x16xf32> to vector<1x16x1xf32>
    %cst_17 = arith.constant 1.000000e+00 : f32
    %29 = vector.broadcast %cst_17 : f32 to vector<1x16x1xf32>
    %30 = arith.divf %29, %28 : vector<1x16x1xf32>
    %31 = vector.broadcast %30 : vector<1x16x1xf32> to vector<1x16x8xf32>
    %32 = arith.mulf %26, %31 : vector<1x16x8xf32>
    %33 = arith.truncf %32 : vector<1x16x8xf32> to vector<1x16x8xbf16>
    %cst_18 = arith.constant dense<0.000000e+00> : vector<1x16x32xf32>
    %34 = tpu.matmul %33, %20, %cst_18 {dimension_numbers = #tpu.dot_dimension_numbers<[2], [1], [1], [2], [0, 0, 0, 1, 1, 2], [0], [0]>} : vector<1x16x8xbf16>, vector<1x8x32xbf16>, vector<1x16x32xf32> -> vector<1x16x32xf32>
    %35 = vector.shape_cast %34 : vector<1x16x32xf32> to vector<16x32xf32>
    %36 = arith.truncf %35 : vector<16x32xf32> to vector<16x32xbf16>
    %c0_19 = arith.constant 0 : index
    %c0_20 = arith.constant 0 : index
    %37 = vector.load %arg7[%c0_19, %c0_20] : memref<32x32xbf16, #tpu.memory_space<vmem>>, vector<32x32xbf16>
    %cst_21 = arith.constant dense<0.000000e+00> : vector<16x32xf32>
    %38 = tpu.matmul %36, %37, %cst_21 {dimension_numbers = #tpu.dot_dimension_numbers<[1], [0], [0], [1], [0, 0, 1, 1], [], []>} : vector<16x32xbf16>, vector<32x32xbf16>, vector<16x32xf32> -> vector<16x32xf32>
    %c0_22 = arith.constant 0 : index
    %c0_23 = arith.constant 0 : index
    %39 = vector.load %arg8[%c0_22, %c0_23] : memref<1x32xf32, #tpu.memory_space<vmem>>, vector<1x32xf32>
    %40 = vector.broadcast %39 : vector<1x32xf32> to vector<16x32xf32>
    %41 = arith.addf %38, %40 : vector<16x32xf32>
    %42 = vector.shape_cast %41 : vector<16x32xf32> to vector<1x16x32xf32>
    %c0_24 = arith.constant 0 : index
    %c0_25 = arith.constant 0 : index
    %c0_26 = arith.constant 0 : index
    %43 = vector.load %arg9[%c0_24, %c0_25, %c0_26] : memref<1x16x32xf32, #tpu.memory_space<vmem>>, vector<1x16x32xf32>
    tpu.vector_store %arg9[%c0_24, %c0_25, %c0_26], %42 {strides = array<i32>} : memref<1x16x32xf32, #tpu.memory_space<vmem>>, vector<1x16x32xf32>,
    %c0_27 = arith.constant 0 : index
    %c0_28 = arith.constant 0 : index
    %c0_29 = arith.constant 0 : index
    %44 = vector.load %arg10[%c0_27, %c0_28, %c0_29] : memref<1x16x8xf32, #tpu.memory_space<vmem>>, vector<1x16x8xf32>
    tpu.vector_store %arg10[%c0_27, %c0_28, %c0_29], %32 {strides = array<i32>} : memref<1x16x8xf32, #tpu.memory_space<vmem>>, vector<1x16x8xf32>,
    return
  }
  func.func @transform_0(%arg0: i32) -> (i32, i32, i32) {
    %c0_i32 = arith.constant 0 : i32
    %c0_i32_0 = arith.constant 0 : i32
    %c0_i32_1 = arith.constant 0 : i32
    return %arg0, %c0_i32, %c0_i32_0 : i32, i32, i32
  }
  func.func @transform_1(%arg0: i32) -> (i32, i32, i32) {
    %c0_i32 = arith.constant 0 : i32
    %c0_i32_0 = arith.constant 0 : i32
    %c0_i32_1 = arith.constant 0 : i32
    return %arg0, %c0_i32, %c0_i32_0 : i32, i32, i32
  }
  func.func @transform_2(%arg0: i32) -> (i32, i32) {
    %c0_i32 = arith.constant 0 : i32
    %c0_i32_0 = arith.constant 0 : i32
    %c0_i32_1 = arith.constant 0 : i32
    return %c0_i32, %c0_i32_0 : i32, i32
  }
  func.func @transform_3(%arg0: i32) -> (i32, i32) {
    %c0_i32 = arith.constant 0 : i32
    %c0_i32_0 = arith.constant 0 : i32
    %c0_i32_1 = arith.constant 0 : i32
    return %c0_i32, %c0_i32_0 : i32, i32
  }
  func.func @transform_4(%arg0: i32) -> (i32, i32) {
    %c0_i32 = arith.constant 0 : i32
    %c0_i32_0 = arith.constant 0 : i32
    %c0_i32_1 = arith.constant 0 : i32
    return %c0_i32, %c0_i32_0 : i32, i32
  }
  func.func @transform_5(%arg0: i32) -> (i32, i32) {
    %c0_i32 = arith.constant 0 : i32
    %c0_i32_0 = arith.constant 0 : i32
    %c0_i32_1 = arith.constant 0 : i32
    return %c0_i32, %c0_i32_0 : i32, i32
  }
  func.func @transform_6(%arg0: i32) -> (i32, i32) {
    %c0_i32 = arith.constant 0 : i32
    %c0_i32_0 = arith.constant 0 : i32
    %c0_i32_1 = arith.constant 0 : i32
    return %c0_i32, %c0_i32_0 : i32, i32
  }
  func.func @transform_7(%arg0: i32) -> (i32, i32) {
    %c0_i32 = arith.constant 0 : i32
    %c0_i32_0 = arith.constant 0 : i32
    %c0_i32_1 = arith.constant 0 : i32
    return %c0_i32, %c0_i32_0 : i32, i32
  }
  func.func @transform_8(%arg0: i32) -> (i32, i32, i32) {
    %c0_i32 = arith.constant 0 : i32
    %c0_i32_0 = arith.constant 0 : i32
    %c0_i32_1 = arith.constant 0 : i32
    return %arg0, %c0_i32, %c0_i32_0 : i32, i32, i32
  }
  func.func @transform_9(%arg0: i32) -> (i32, i32, i32) {
    %c0_i32 = arith.constant 0 : i32
    %c0_i32_0 = arith.constant 0 : i32
    %c0_i32_1 = arith.constant 0 : i32
    return %arg0, %c0_i32, %c0_i32_0 : i32, i32, i32
  }
}

</mosaic_0001>

<llo_original>
// kernel: tpu_custom_call.1
$region0: #{tpu_custom_call.1}
  #allocation0 [shape = 'u32[]', space=smem, size = 0x4, offset = 0x4, fixed_abs, tag = 'smem constant byte address 0x4 - core index']
  #allocation1 [shape = 'u32[144,128]{1,0:T(1,128)}', space=vmem, size = 0x12000, scoped, tag = 'internal scratch']
  %s0 = inlined_call_operand.vmem [shape: bf16[2,16,64], index: 0, kind: input, shape index: {}]
  %s1 = inlined_call_operand.hbm [shape: bf16[2,8,24], index: 1, kind: input, shape index: {}]
  %s2 = inlined_call_operand.vmem [shape: bf16[64,32], index: 2, kind: input, shape index: {}]
  %s3 = inlined_call_operand.vmem [shape: f32[1,32], index: 3, kind: input, shape index: {}]
  %s4 = inlined_call_operand.vmem [shape: bf16[24,64], index: 4, kind: input, shape index: {}]
  %s5 = inlined_call_operand.vmem [shape: f32[1,64], index: 5, kind: input, shape index: {}]
  %s6 = inlined_call_operand.vmem [shape: bf16[32,32], index: 6, kind: input, shape index: {}]
  %s7 = inlined_call_operand.vmem [shape: f32[1,32], index: 7, kind: input, shape index: {}]
  %s8 = inlined_call_operand.vmem [shape: f32[2,32,16], index: 8, kind: output, shape index: {0}]
  %s9 = inlined_call_operand.vmem [shape: f32[2,16,8], index: 9, kind: output, shape index: {1}]
  %10 = xla_tuple %s8, %s9
  %s11 = sld [smem:[#allocation0]]
  $region77: #{tpu_custom_call.1} parent=0
    _
  %s13 = ssub.s32 1, %s11
  %s14 = scalar_select 0, %s13, %s11
  $region1: #{tpu_custom_call.1} parent=0
    #allocation2 [shape = 'u8[4096]{0}', space=vmem, size = 0x1000, scoped, tag = 'input window, operand 1']
    #allocation3 [shape = 's32[2]{0}', space=sflag, size = 0x8, scoped, tag = 'scoped memory for tpu_custom_call.1']
    %15 = vsyncpa [#allocation3], 0
    %s16 = scalar_lea.sflag [#allocation3], 1
    %17 = vsyncpa %s16, 0
    loop: start=0, step=1, limit=4
    $region2: #{tpu_custom_call.1} parent=1 // loop_pre_header
      _
    $region3: #{tpu_custom_call.1} parent=1 // loop_header
      %s19 = sphi 0, %s23
      %p20 = scmp.ge.s32.totalorder %s19, 4
      %s29 = sphi 0, %s31
      %s32 = sphi 0, %s29
      %s33 = sphi 0, %s32
      %s49 = sphi 0, %s33
      %s55 = sphi 0, %s57
      %s58 = sphi 0, %s55
      %s59 = sphi 0, %s58
      %s75 = sphi 0, %s59
      %s79 = sphi 0, %s79
      %s81 = sphi 0, %s79
      %s82 = sphi 0, %s81
      %s96 = sphi 0, %s82
      %s100 = sphi 0, %s100
      %s102 = sphi 0, %s100
      %s103 = sphi 0, %s102
      %s117 = sphi 0, %s103
      %s121 = sphi 0, %s121
      %s123 = sphi 0, %s121
      %s124 = sphi 0, %s123
      %s138 = sphi 0, %s124
      %s142 = sphi 0, %s142
      %s144 = sphi 0, %s142
      %s145 = sphi 0, %s144
      %s159 = sphi 0, %s145
      %s163 = sphi 0, %s163
      %s165 = sphi 0, %s163
      %s166 = sphi 0, %s165
      %s180 = sphi 0, %s166
      %s184 = sphi 0, %s184
      %s186 = sphi 0, %s184
      %s187 = sphi 0, %s186
      %s201 = sphi 0, %s187
      %s207 = sphi 0, %s209
      %s210 = sphi 0, %s207
      %s211 = sphi 0, %s210
      %s227 = sphi 0, %s211
      %s233 = sphi 0, %s235
      %s236 = sphi 0, %s233
      %s237 = sphi 0, %s236
      %s253 = sphi 0, %s237
    $region4: #{tpu_custom_call.1} parent=1 // loop_header_branch
      %22 = sbr.rel (%p20) target = $region8
    $region5: #{tpu_custom_call.1} parent=1 // loop_body
      %s24 = ssub.s32 %s19, 1
      %s25 = ssub.s32 %s19, 2
      %s26 = sadd.s32 %s19, 1
      %s27 = ssub.s32 %s19, %s26
      %p28 = scmp.eq.s32.totalorder %s27, 0
      %s30 = sadd.s32 %s29, 1
      %s31 = scalar_select %p28, %s29, %s30
      %p34 = pneg %p28
      %p35 = scmp.eq.s32.totalorder %s19, 1
      %p36 = por %p34, %p35
      %p37 = scmp.ne.s32.totalorder %s29, %s32
      %p38 = scmp.eq.s32.totalorder %s19, 0
      %p39 = por %p37, %p38
      %p40 = scmp.ne.s32.totalorder %s29, %s32
      %p41 = scmp.eq.s32.totalorder %s24, 1
      %p42 = por %p40, %p41
      %p43 = scmp.ne.s32.totalorder %s32, %s33
      %p44 = scmp.eq.s32.totalorder %s24, 0
      %p45 = por %p43, %p44
      %p46 = scmp.ne.s32.totalorder %s32, %s33
      %p47 = scmp.eq.s32.totalorder %s25, 1
      %p48 = por %p46, %p47
      %p50 = scmp.ne.s32.totalorder %s33, %s49
      %p51 = scmp.eq.s32.totalorder %s25, 0
      %p52 = por %p50, %p51
      %s53 = ssub.s32 %s19, %s26
      %p54 = scmp.eq.s32.totalorder %s53, 0
      %s56 = sadd.s32 %s55, 1
      %s57 = scalar_select %p54, %s55, %s56
      %p60 = pneg %p54
      %p61 = scmp.eq.s32.totalorder %s19, 1
      %p62 = por %p60, %p61
      %p63 = scmp.ne.s32.totalorder %s55, %s58
      %p64 = scmp.eq.s32.totalorder %s19, 0
      %p65 = por %p63, %p64
      %p66 = scmp.ne.s32.totalorder %s55, %s58
      %p67 = scmp.eq.s32.totalorder %s24, 1
      %p68 = por %p66, %p67
      %p69 = scmp.ne.s32.totalorder %s58, %s59
      %p70 = scmp.eq.s32.totalorder %s24, 0
      %p71 = por %p69, %p70
      %p72 = scmp.ne.s32.totalorder %s58, %s59
      %p73 = scmp.eq.s32.totalorder %s25, 1
      %p74 = por %p72, %p73
      %p76 = scmp.ne.s32.totalorder %s59, %s75
      %p77 = scmp.eq.s32.totalorder %s25, 0
      %p78 = por %p76, %p77
      %s80 = sadd.s32 %s79, 1
      %p83 = scmp.eq.s32.totalorder %s19, 1
      %p84 = scmp.ne.s32.totalorder %s79, %s81
      %p85 = scmp.eq.s32.totalorder %s19, 0
      %p86 = por %p84, %p85
      %p87 = scmp.ne.s32.totalorder %s79, %s81
      %p88 = scmp.eq.s32.totalorder %s24, 1
      %p89 = por %p87, %p88
      %p90 = scmp.ne.s32.totalorder %s81, %s82
      %p91 = scmp.eq.s32.totalorder %s24, 0
      %p92 = por %p90, %p91
      %p93 = scmp.ne.s32.totalorder %s81, %s82
      %p94 = scmp.eq.s32.totalorder %s25, 1
      %p95 = por %p93, %p94
      %p97 = scmp.ne.s32.totalorder %s82, %s96
      %p98 = scmp.eq.s32.totalorder %s25, 0
      %p99 = por %p97, %p98
      %s101 = sadd.s32 %s100, 1
      %p104 = scmp.eq.s32.totalorder %s19, 1
      %p105 = scmp.ne.s32.totalorder %s100, %s102
      %p106 = scmp.eq.s32.totalorder %s19, 0
      %p107 = por %p105, %p106
      %p108 = scmp.ne.s32.totalorder %s100, %s102
      %p109 = scmp.eq.s32.totalorder %s24, 1
      %p110 = por %p108, %p109
      %p111 = scmp.ne.s32.totalorder %s102, %s103
      %p112 = scmp.eq.s32.totalorder %s24, 0
      %p113 = por %p111, %p112
      %p114 = scmp.ne.s32.totalorder %s102, %s103
      %p115 = scmp.eq.s32.totalorder %s25, 1
      %p116 = por %p114, %p115
      %p118 = scmp.ne.s32.totalorder %s103, %s117
      %p119 = scmp.eq.s32.totalorder %s25, 0
      %p120 = por %p118, %p119
      %s122 = sadd.s32 %s121, 1
      %p125 = scmp.eq.s32.totalorder %s19, 1
      %p126 = scmp.ne.s32.totalorder %s121, %s123
      %p127 = scmp.eq.s32.totalorder %s19, 0
      %p128 = por %p126, %p127
      %p129 = scmp.ne.s32.totalorder %s121, %s123
      %p130 = scmp.eq.s32.totalorder %s24, 1
      %p131 = por %p129, %p130
      %p132 = scmp.ne.s32.totalorder %s123, %s124
      %p133 = scmp.eq.s32.totalorder %s24, 0
      %p134 = por %p132, %p133
      %p135 = scmp.ne.s32.totalorder %s123, %s124
      %p136 = scmp.eq.s32.totalorder %s25, 1
      %p137 = por %p135, %p136
      %p139 = scmp.ne.s32.totalorder %s124, %s138
      %p140 = scmp.eq.s32.totalorder %s25, 0
      %p141 = por %p139, %p140
      %s143 = sadd.s32 %s142, 1
      %p146 = scmp.eq.s32.totalorder %s19, 1
      %p147 = scmp.ne.s32.totalorder %s142, %s144
      %p148 = scmp.eq.s32.totalorder %s19, 0
      %p149 = por %p147, %p148
      %p150 = scmp.ne.s32.totalorder %s142, %s144
      %p151 = scmp.eq.s32.totalorder %s24, 1
      %p152 = por %p150, %p151
      %p153 = scmp.ne.s32.totalorder %s144, %s145
      %p154 = scmp.eq.s32.totalorder %s24, 0
      %p155 = por %p153, %p154
      %p156 = scmp.ne.s32.totalorder %s144, %s145
      %p157 = scmp.eq.s32.totalorder %s25, 1
      %p158 = por %p156, %p157
      %p160 = scmp.ne.s32.totalorder %s145, %s159
      %p161 = scmp.eq.s32.totalorder %s25, 0
      %p162 = por %p160, %p161
      %s164 = sadd.s32 %s163, 1
      %p167 = scmp.eq.s32.totalorder %s19, 1
      %p168 = scmp.ne.s32.totalorder %s163, %s165
      %p169 = scmp.eq.s32.totalorder %s19, 0
      %p170 = por %p168, %p169
      %p171 = scmp.ne.s32.totalorder %s163, %s165
      %p172 = scmp.eq.s32.totalorder %s24, 1
      %p173 = por %p171, %p172
      %p174 = scmp.ne.s32.totalorder %s165, %s166
      %p175 = scmp.eq.s32.totalorder %s24, 0
      %p176 = por %p174, %p175
      %p177 = scmp.ne.s32.totalorder %s165, %s166
      %p178 = scmp.eq.s32.totalorder %s25, 1
      %p179 = por %p177, %p178
      %p181 = scmp.ne.s32.totalorder %s166, %s180
      %p182 = scmp.eq.s32.totalorder %s25, 0
      %p183 = por %p181, %p182
      %s185 = sadd.s32 %s184, 1
      %p188 = scmp.eq.s32.totalorder %s19, 1
      %p189 = scmp.ne.s32.totalorder %s184, %s186
      %p190 = scmp.eq.s32.totalorder %s19, 0
      %p191 = por %p189, %p190
      %p192 = scmp.ne.s32.totalorder %s184, %s186
      %p193 = scmp.eq.s32.totalorder %s24, 1
      %p194 = por %p192, %p193
      %p195 = scmp.ne.s32.totalorder %s186, %s187
      %p196 = scmp.eq.s32.totalorder %s24, 0
      %p197 = por %p195, %p196
      %p198 = scmp.ne.s32.totalorder %s186, %s187
      %p199 = scmp.eq.s32.totalorder %s25, 1
      %p200 = por %p198, %p199
      %p202 = scmp.ne.s32.totalorder %s187, %s201
      %p203 = scmp.eq.s32.totalorder %s25, 0
      %p204 = por %p202, %p203
      %s205 = ssub.s32 %s19, %s26
      %p206 = scmp.eq.s32.totalorder %s205, 0
      %s208 = sadd.s32 %s207, 1
      %s209 = scalar_select %p206, %s207, %s208
      %p212 = pneg %p206
      %p213 = scmp.eq.s32.totalorder %s19, 1
      %p214 = por %p212, %p213
      %p215 = scmp.ne.s32.totalorder %s207, %s210
      %p216 = scmp.eq.s32.totalorder %s19, 0
      %p217 = por %p215, %p216
      %p218 = scmp.ne.s32.totalorder %s207, %s210
      %p219 = scmp.eq.s32.totalorder %s24, 1
      %p220 = por %p218, %p219
      %p221 = scmp.ne.s32.totalorder %s210, %s211
      %p222 = scmp.eq.s32.totalorder %s24, 0
      %p223 = por %p221, %p222
      %p224 = scmp.ne.s32.totalorder %s210, %s211
      %p225 = scmp.eq.s32.totalorder %s25, 1
      %p226 = por %p224, %p225
      %p228 = scmp.ne.s32.totalorder %s211, %s227
      %p229 = scmp.eq.s32.totalorder %s25, 0
      %p230 = por %p228, %p229
      %s231 = ssub.s32 %s19, %s26
      %p232 = scmp.eq.s32.totalorder %s231, 0
      %s234 = sadd.s32 %s233, 1
      %s235 = scalar_select %p232, %s233, %s234
      %p238 = pneg %p232
      %p239 = scmp.eq.s32.totalorder %s19, 1
      %p240 = por %p238, %p239
      %p241 = scmp.ne.s32.totalorder %s233, %s236
      %p242 = scmp.eq.s32.totalorder %s19, 0
      %p243 = por %p241, %p242
      %p244 = scmp.ne.s32.totalorder %s233, %s236
      %p245 = scmp.eq.s32.totalorder %s24, 1
      %p246 = por %p244, %p245
      %p247 = scmp.ne.s32.totalorder %s236, %s237
      %p248 = scmp.eq.s32.totalorder %s24, 0
      %p249 = por %p247, %p248
      %p250 = scmp.ne.s32.totalorder %s236, %s237
      %p251 = scmp.eq.s32.totalorder %s25, 1
      %p252 = por %p250, %p251
      %p254 = scmp.ne.s32.totalorder %s237, %s253
      %p255 = scmp.eq.s32.totalorder %s25, 0
      %p256 = por %p254, %p255
      %p257 = scmp.le.s32.totalorder 1, %s19
      %p258 = scmp.lt.s32.totalorder %s19, 3
      %p259 = pnand %p257, %p258
      %p260 = pneg %p259
      // Predicated region
      $region9: #{tpu_custom_call.1} parent=5 // pred_check
        _
      $region10: #{tpu_custom_call.1} parent=5 // pred_check_branch
        %262 = sbr.rel (%p259) target = $region12
      $region11: #{tpu_custom_call.1} parent=5 // pred_region
        %s263 = ssub.s32 %s19, 1
        // Predicated region
        $region13: #{tpu_custom_call.1} parent=11 // pred_check
          %p264 = pneg %p92
        $region14: #{tpu_custom_call.1} parent=11 // pred_check_branch
          %266 = sbr.rel (%p264) target = $region16
        $region15: #{tpu_custom_call.1} parent=11 // pred_region
          _
        $region16: #{tpu_custom_call.1} parent=11 // pred_fallthru
          _
        // Predicated region
        $region17: #{tpu_custom_call.1} parent=11 // pred_check
          %p267 = pneg %p113
        $region18: #{tpu_custom_call.1} parent=11 // pred_check_branch
          %269 = sbr.rel (%p267) target = $region20
        $region19: #{tpu_custom_call.1} parent=11 // pred_region
          _
        $region20: #{tpu_custom_call.1} parent=11 // pred_fallthru
          _
        // Predicated region
        $region21: #{tpu_custom_call.1} parent=11 // pred_check
          %p270 = pneg %p134
        $region22: #{tpu_custom_call.1} parent=11 // pred_check_branch
          %272 = sbr.rel (%p270) target = $region24
        $region23: #{tpu_custom_call.1} parent=11 // pred_region
          _
        $region24: #{tpu_custom_call.1} parent=11 // pred_fallthru
          _
        // Predicated region
        $region25: #{tpu_custom_call.1} parent=11 // pred_check
          %p273 = pneg %p155
        $region26: #{tpu_custom_call.1} parent=11 // pred_check_branch
          %275 = sbr.rel (%p273) target = $region28
        $region27: #{tpu_custom_call.1} parent=11 // pred_region
          _
        $region28: #{tpu_custom_call.1} parent=11 // pred_fallthru
          _
        // Predicated region
        $region29: #{tpu_custom_call.1} parent=11 // pred_check
          %p276 = pneg %p176
        $region30: #{tpu_custom_call.1} parent=11 // pred_check_branch
          %278 = sbr.rel (%p276) target = $region32
        $region31: #{tpu_custom_call.1} parent=11 // pred_region
          _
        $region32: #{tpu_custom_call.1} parent=11 // pred_fallthru
          _
        // Predicated region
        $region33: #{tpu_custom_call.1} parent=11 // pred_check
          %p279 = pneg %p197
        $region34: #{tpu_custom_call.1} parent=11 // pred_check_branch
          %281 = sbr.rel (%p279) target = $region36
        $region35: #{tpu_custom_call.1} parent=11 // pred_region
          _
        $region36: #{tpu_custom_call.1} parent=11 // pred_fallthru
          _
      $region12: #{tpu_custom_call.1} parent=5 // pred_fallthru
        _
      %p282 = scmp.lt.s32.totalorder %s19, 2
      // Predicated region
      $region37: #{tpu_custom_call.1} parent=5 // pred_check
        %p283 = pneg %p282
      $region38: #{tpu_custom_call.1} parent=5 // pred_check_branch
        %285 = sbr.rel (%p283) target = $region40
      $region39: #{tpu_custom_call.1} parent=5 // pred_region
        // Predicated region
        $region41: #{tpu_custom_call.1} parent=39 // pred_check
          %p286 = pneg %p39
        $region42: #{tpu_custom_call.1} parent=39 // pred_check_branch
          %288 = sbr.rel (%p286) target = $region44
        $region43: #{tpu_custom_call.1} parent=39 // pred_region
          %p289 = scmp.lt.s32.totalorder %s19, 1
          %s290 = scalar_select %p289, %s19, 1
          %s291 = smul.addr %s290, 2
          %s292 = smul.addr %s291, 4
          %s293 = scalar_lea.vmem %s0, %s292
        $region44: #{tpu_custom_call.1} parent=39 // pred_fallthru
          _
        // Predicated region
        $region45: #{tpu_custom_call.1} parent=39 // pred_check
          %p294 = pneg %p65
        $region46: #{tpu_custom_call.1} parent=39 // pred_check_branch
          %296 = sbr.rel (%p294) target = $region48
        $region47: #{tpu_custom_call.1} parent=39 // pred_region
          %s297 = sand.u32 %s55, 1
          %s298 = scalar_lea.sflag [#allocation3], %s297
          %s299 = sand.u32 %s55, 1
          %s300 = smul.addr %s299, 4
          %s301 = scalar_lea.vmem [#allocation2], %s300
          %s303 = ssub.s32 64, 64
          %304 = vsyncadd %s298, %s303
          %s305 = smul.addr %s19, 64
          %s306 = scalar_lea.hbm %s1, %s305
          %s308 = sshll.u32 %s301, 4
          %s309 = int_to_ptr.vmem [resolvable:$true] %s308
          %311 = dma.hbm_to_vmem [thread:$0]  %s306, 64, %s309, %s298
        $region48: #{tpu_custom_call.1} parent=39 // pred_fallthru
          _
      $region40: #{tpu_custom_call.1} parent=5 // pred_fallthru
        _
      %p312 = scmp.le.s32.totalorder 1, %s19
      %p313 = scmp.lt.s32.totalorder %s19, 3
      %p314 = pnand %p312, %p313
      %p315 = pneg %p314
      // Predicated region
      $region49: #{tpu_custom_call.1} parent=5 // pred_check
        _
      $region50: #{tpu_custom_call.1} parent=5 // pred_check_branch
        %317 = sbr.rel (%p314) target = $region52
      $region51: #{tpu_custom_call.1} parent=5 // pred_region
        %s318 = ssub.s32 %s19, 1
        %s319 = sand.u32 %s58, 1
        %s320 = scalar_lea.sflag [#allocation3], %s319
        %s321 = sand.u32 %s58, 1
        %s322 = smul.addr %s321, 4
        %s323 = scalar_lea.vmem [#allocation2], %s322
        // Predicated region
        $region53: #{tpu_custom_call.1} parent=51 // pred_check
          %p324 = pneg %p71
        $region54: #{tpu_custom_call.1} parent=51 // pred_check_branch
          %326 = sbr.rel (%p324) target = $region56
        $region55: #{tpu_custom_call.1} parent=51 // pred_region
          %327 = dma.done %s320, 64
        $region56: #{tpu_custom_call.1} parent=51 // pred_fallthru
          _
        %p328 = scmp.lt.s32.totalorder %s24, 1
        %s329 = scalar_select %p328, %s24, 1
        %s330 = smul.addr %s329, 2
        %s331 = smul.addr %s330, 4
        %s332 = scalar_lea.vmem %s0, %s331
        %p333 = pneg %p45
        %p334 = pneg %p42
        %s335 = sand.u32 %s58, 1
        %s336 = scalar_lea.sflag [#allocation3], %s335
        %s337 = sand.u32 %s58, 1
        %s338 = smul.addr %s337, 4
        %s339 = scalar_lea.vmem [#allocation2], %s338
        %p340 = pneg %p71
        %p341 = pneg %p68
        %p342 = pneg %p92
        %p343 = pneg %p89
        %p344 = pneg %p113
        %p345 = pneg %p110
        %p346 = pneg %p134
        %p347 = pneg %p131
        %p348 = pneg %p155
        %p349 = pneg %p152
        %p350 = pneg %p176
        %p351 = pneg %p173
        %p352 = pneg %p197
        %p353 = pneg %p194
        %p354 = pneg %p223
        %p355 = pneg %p220
        %p356 = scmp.lt.s32.totalorder %s24, 1
        %s357 = scalar_select %p356, %s24, 1
        %s358 = smul.addr %s357, 4
        %s359 = smul.addr %s358, 8
        %s360 = scalar_lea.vmem %s8, %s359
        %p361 = pneg %p249
        %p362 = pneg %p246
        %p363 = scmp.lt.s32.totalorder %s24, 1
        %s364 = scalar_select %p363, %s24, 1
        %s365 = smul.addr %s364, 2
        %s366 = smul.addr %s365, 8
        %s367 = scalar_lea.vmem %s9, %s366
        %p368 = scmp.lt.s32.totalorder %s24, 1
        %s369 = scalar_select %p368, %s24, 1
        %s370 = smul.addr %s369, 2
        %s371 = smul.addr %s370, 4
        %s372 = scalar_lea.vmem %s0, %s371
        %p373 = scmp.lt.s32.totalorder %s24, 1
        %s374 = scalar_select %p373, %s24, 1
        %s375 = smul.addr %s374, 4
        %s376 = smul.addr %s375, 8
        %s377 = scalar_lea.vmem %s8, %s376
        %p378 = scmp.lt.s32.totalorder %s24, 1
        %s379 = scalar_select %p378, %s24, 1
        %s380 = smul.addr %s379, 2
        %s381 = smul.addr %s380, 8
        %s382 = scalar_lea.vmem %s9, %s381
        %v384 = vld [vmem:[%s372] sm:$0xf]
        %v385 = vld [vmem:[%s372 + $0x4] sm:$0xf]
        %v386 = vld [vmem:[%s323] sm:$0xf]
        %v387 = vld [vmem:[%s2] sm:$0xf]
        %v388 = vld [vmem:[%s2 + $0x4] sm:$0xf]
        %v389 = vld [vmem:[%s2 + $0x8] sm:$0xf]
        %v390 = vld [vmem:[%s2 + $0xc] sm:$0xf]
        %v391 = vld [vmem:[%s2 + $0x10] sm:$0xf]
        %v392 = vld [vmem:[%s2 + $0x14] sm:$0xf]
        %v393 = vld [vmem:[%s2 + $0x18] sm:$0xf]
        %v394 = vld [vmem:[%s2 + $0x1c] sm:$0xf]
        %v395 = vld [vmem:[%s3] sm:$0x1]
        %v397 = vlaneseq
        %v398 = vshrl.u32 %v397, 7
        %v399 = vsub.s32 0, %v398
        %v400 = vrot.slane %v395, %v399
        %v404 = vunpack.c.l.b16 %v384
        %v405 = vunpack.c.l.b16 %v385
        %v406 = vpack.c.b16 %v405, %v404
        %v415 = vunpack.c.l.b16 %v387
        %v416 = vunpack.c.l.b16 %v388
        %v417 = vunpack.c.l.b16 %v389
        %v418 = vunpack.c.l.b16 %v390
        %v419 = vunpack.c.l.b16 %v391
        %v420 = vunpack.c.l.b16 %v392
        %v421 = vunpack.c.l.b16 %v393
        %v422 = vunpack.c.l.b16 %v394
        %v423 = vpack.c.b16 %v416, %v415
        %v424 = vpack.c.b16 %v418, %v417
        %v425 = vpack.c.b16 %v420, %v419
        %v426 = vpack.c.b16 %v422, %v421
        %vm431 = vcmask 523264
        %v433 = vsel %vm431, %v406, 0
        %435 = vmatprep.subr.bf16.mxu0 0
        %436 = vmatpush1.bf16.msra.mxu0 0
        %437 = vmatprep.subr.bf16.mxu0 0
        %438 = vmatpush1.bf16.msra.mxu0 0
        %439 = vmatprep.subr.bf16.mxu0 0
        %440 = vmatpush1.bf16.msra.mxu0 0
        %441 = vmatprep.subr.bf16.mxu0 0
        %442 = vmatpush1.bf16.msra.mxu0 0
        %443 = vmatprep.subr.bf16.mxu0 0
        %444 = vmatpush1.bf16.msra.mxu0 %v426
        %445 = vmatprep.subr.bf16.mxu0 0
        %446 = vmatpush1.bf16.msra.mxu0 %v425
        %447 = vmatprep.subr.bf16.mxu0 0
        %448 = vmatpush1.bf16.msra.mxu0 %v424
        %449 = vmatprep.subr.bf16.mxu0 0
        %450 = vmatpush1.bf16.msra.mxu0 %v423
        %451 = vmatprep.subr.bf16.mxu0 0
        %452 = vmatpush2.bf16.msra.mxu0 0
        %453 = vmatprep.subr.bf16.mxu0 0
        %454 = vmatpush2.bf16.msra.mxu0 0
        %455 = vmatprep.subr.bf16.mxu0 0
        %456 = vmatpush2.bf16.msra.mxu0 0
        %457 = vmatprep.subr.bf16.mxu0 0
        %458 = vmatpush2.bf16.msra.mxu0 0
        %459 = vmatprep.subr.bf16.mxu0 0
        %460 = vmatpush2.bf16.msra.mxu0 0
        %461 = vmatprep.subr.bf16.mxu0 0
        %462 = vmatpush2.bf16.msra.mxu0 0
        %463 = vmatprep.subr.bf16.mxu0 0
        %464 = vmatpush2.bf16.msra.mxu0 0
        %465 = vmatprep.subr.bf16.mxu0 0
        %466 = vmatpush2.bf16.msra.mxu0 0
        %467 = vmatprep.mubr.bf16.mxu0 0
        %468 = vmatmul.mubr.bf16.gmra.mxu0 %v433
        %v469 = vpop.f32.mrf.mxu0
        %v470 = vadd.f32 %v400, %v469
        %v471 = vpop.f32.mrf.mxu0
        %v472 = vpop.f32.mrf.mxu0
        %v473 = vadd.f32 %v400, %v472
        %v474 = vpop.f32.mrf.mxu0
        %475 = vdwg.mxu0
        %v476 = vld [vmem:[%s4] sm:$0xf]
        %v477 = vld [vmem:[%s4 + $0x4] sm:$0xf]
        %v478 = vld [vmem:[%s4 + $0x8] sm:$0xf]
        %v479 = vld [vmem:[%s5] sm:$0x1]
        %v481 = vlaneseq
        %v482 = vshrl.u32 %v481, 7
        %v483 = vsub.s32 0, %v482
        %v484 = vrot.slane %v479, %v483
        %v489 = vunpack.c.l.b16 %v476
        %v490 = vunpack.c.l.b16 %v477
        %v491 = vunpack.c.l.b16 %v478
        %v492 = vpack.c.b16 %v490, %v489
        %v493 = vpack.c.b16 %v491, %v491
        %vm495 = vcmask 195584
        %v497 = vsel %vm495, %v386, 0
        %vm499 = vcmask 1043456
        %v501 = vsel %vm499, %v493, 0
        %503 = vmatprep.subr.bf16.mxu0 0
        %504 = vmatpush1.bf16.msra.mxu0 0
        %505 = vmatprep.subr.bf16.mxu0 0
        %506 = vmatpush1.bf16.msra.mxu0 0
        %507 = vmatprep.subr.bf16.mxu0 0
        %508 = vmatpush1.bf16.msra.mxu0 0
        %509 = vmatprep.subr.bf16.mxu0 0
        %510 = vmatpush1.bf16.msra.mxu0 0
        %511 = vmatprep.subr.bf16.mxu0 0
        %512 = vmatpush1.bf16.msra.mxu0 0
        %513 = vmatprep.subr.bf16.mxu0 0
        %514 = vmatpush1.bf16.msra.mxu0 0
        %515 = vmatprep.subr.bf16.mxu0 0
        %516 = vmatpush1.bf16.msra.mxu0 %v501
        %517 = vmatprep.subr.bf16.mxu0 0
        %518 = vmatpush1.bf16.msra.mxu0 %v492
        %519 = vmatprep.subr.bf16.mxu0 0
        %520 = vmatpush2.bf16.msra.mxu0 0
        %521 = vmatprep.subr.bf16.mxu0 0
        %522 = vmatpush2.bf16.msra.mxu0 0
        %523 = vmatprep.subr.bf16.mxu0 0
        %524 = vmatpush2.bf16.msra.mxu0 0
        %525 = vmatprep.subr.bf16.mxu0 0
        %526 = vmatpush2.bf16.msra.mxu0 0
        %527 = vmatprep.subr.bf16.mxu0 0
        %528 = vmatpush2.bf16.msra.mxu0 0
        %529 = vmatprep.subr.bf16.mxu0 0
        %530 = vmatpush2.bf16.msra.mxu0 0
        %531 = vmatprep.subr.bf16.mxu0 0
        %532 = vmatpush2.bf16.msra.mxu0 0
        %533 = vmatprep.subr.bf16.mxu0 0
        %534 = vmatpush2.bf16.msra.mxu0 0
        %535 = vmatprep.mubr.bf16.mxu0 0
        %536 = vmatmul.mubr.bf16.gmra.mxu0 %v497
        %v537 = vpop.f32.mrf.mxu0
        %v538 = vadd.f32 %v484, %v537
        %v539 = vpop.f32.mrf.mxu0
        %v540 = vpop.f32.mrf.mxu0
        %v541 = vpop.f32.mrf.mxu0
        %542 = vdwg.mxu0
        %v543 = vpack.c.bf16 %v473, %v470
        %v544 = vpack.c.bf16 %v538, %v538
        %vm545 = vcmask 261120
        %v547 = vsel %vm545, %v543, 0
        %v550 = vsel %vm545, %v544, 0
        %552 = vmatprep.subr.bf16.mxu0 0
        %553 = vmatpush1.bf16.xpose.msra.mxu0 0
        %554 = vmatprep.subr.bf16.mxu0 0
        %555 = vmatpush1.bf16.xpose.msra.mxu0 0
        %556 = vmatprep.subr.bf16.mxu0 0
        %557 = vmatpush1.bf16.xpose.msra.mxu0 0
        %558 = vmatprep.subr.bf16.mxu0 0
        %559 = vmatpush1.bf16.xpose.msra.mxu0 0
        %560 = vmatprep.subr.bf16.mxu0 0
        %561 = vmatpush1.bf16.xpose.msra.mxu0 0
        %562 = vmatprep.subr.bf16.mxu0 0
        %563 = vmatpush1.bf16.xpose.msra.mxu0 0
        %564 = vmatprep.subr.bf16.mxu0 0
        %565 = vmatpush1.bf16.xpose.msra.mxu0 0
        %566 = vmatprep.subr.bf16.mxu0 0
        %567 = vmatpush1.bf16.xpose.msra.mxu0 %v550
        %568 = vmatprep.subr.bf16.mxu0 0
        %569 = vmatpush2.bf16.xpose.msra.mxu0 0
        %570 = vmatprep.subr.bf16.mxu0 0
        %571 = vmatpush2.bf16.xpose.msra.mxu0 0
        %572 = vmatprep.subr.bf16.mxu0 0
        %573 = vmatpush2.bf16.xpose.msra.mxu0 0
        %574 = vmatprep.subr.bf16.mxu0 0
        %575 = vmatpush2.bf16.xpose.msra.mxu0 0
        %576 = vmatprep.subr.bf16.mxu0 0
        %577 = vmatpush2.bf16.xpose.msra.mxu0 0
        %578 = vmatprep.subr.bf16.mxu0 0
        %579 = vmatpush2.bf16.xpose.msra.mxu0 0
        %580 = vmatprep.subr.bf16.mxu0 0
        %581 = vmatpush2.bf16.xpose.msra.mxu0 0
        %582 = vmatprep.subr.bf16.mxu0 0
        %583 = vmatpush2.bf16.xpose.msra.mxu0 0
        %584 = vmatprep.mubr.bf16.mxu0 0
        %585 = vmatmul.mubr.bf16.gmra.mxu0 %v547
        %v586 = vpop.f32.mrf.mxu0
        %v587 = vadd.f32 0.0, %v586
        %v588 = vpop.f32.mrf.mxu0
        %v589 = vpop.f32.mrf.mxu0
        %v590 = vadd.f32 0.0, %v589
        %v591 = vpop.f32.mrf.mxu0
        %592 = vdwg.mxu0
        %vm593 = vcmask 64512
        %v594 = vsel %vm593, %v587, -inf
        %595 = vmax.xlane.f32.xlu0 %v594
        %v596 = vpop.xlane.xlu0 %595
        %v597 = vsel %vm593, %v590, -inf
        %598 = vmax.xlane.f32.xlu0 %v597
        %v599 = vpop.xlane.xlu0 %598
        %v600 = vsub.f32 %v587, %v596
        %v601 = vsub.f32 %v590, %v599
        %v602 = vmul.f32 %v600, 1.442695
        %v603 = vpow.pop %v602
        %v604 = vmul.f32 %v601, 1.442695
        %v605 = vpow.pop %v604
        %v606 = vsel %vm593, %v603, 0.0
        %607 = vadd.xlane.f32.xlu0 %v606
        %v608 = vpop.xlane.xlu0 %607
        %v609 = vsel %vm593, %v605, 0.0
        %610 = vadd.xlane.f32.xlu0 %v609
        %v611 = vpop.xlane.xlu0 %610
        %v612 = vrcp.pop %v608
        %v613 = vmul.f32 1.0, %v612
        %v614 = vrcp.pop %v611
        %v615 = vmul.f32 1.0, %v614
        %v616 = vmul.f32 %v603, %v613
        %v617 = vmul.f32 %v605, %v615
        %v618 = vpack.c.bf16 %v617, %v616
        %620 = vrot.lane.b32.xlu0 %v544, 96
        %v621 = vpop.permute.xlu0 %620
        %v623 = vsel %vm593, %v618, 0
        %v626 = vsel %vm499, %v621, 0
        %628 = vmatprep.subr.bf16.mxu0 0
        %629 = vmatpush1.bf16.msra.mxu0 0
        %630 = vmatprep.subr.bf16.mxu0 0
        %631 = vmatpush1.bf16.msra.mxu0 0
        %632 = vmatprep.subr.bf16.mxu0 0
        %633 = vmatpush1.bf16.msra.mxu0 0
        %634 = vmatprep.subr.bf16.mxu0 0
        %635 = vmatpush1.bf16.msra.mxu0 0
        %636 = vmatprep.subr.bf16.mxu0 0
        %637 = vmatpush1.bf16.msra.mxu0 0
        %638 = vmatprep.subr.bf16.mxu0 0
        %639 = vmatpush1.bf16.msra.mxu0 0
        %640 = vmatprep.subr.bf16.mxu0 0
        %641 = vmatpush1.bf16.msra.mxu0 0
        %642 = vmatprep.subr.bf16.mxu0 0
        %643 = vmatpush1.bf16.msra.mxu0 %v626
        %644 = vmatprep.subr.bf16.mxu0 0
        %645 = vmatpush2.bf16.msra.mxu0 0
        %646 = vmatprep.subr.bf16.mxu0 0
        %647 = vmatpush2.bf16.msra.mxu0 0
        %648 = vmatprep.subr.bf16.mxu0 0
        %649 = vmatpush2.bf16.msra.mxu0 0
        %650 = vmatprep.subr.bf16.mxu0 0
        %651 = vmatpush2.bf16.msra.mxu0 0
        %652 = vmatprep.subr.bf16.mxu0 0
        %653 = vmatpush2.bf16.msra.mxu0 0
        %654 = vmatprep.subr.bf16.mxu0 0
        %655 = vmatpush2.bf16.msra.mxu0 0
        %656 = vmatprep.subr.bf16.mxu0 0
        %657 = vmatpush2.bf16.msra.mxu0 0
        %658 = vmatprep.subr.bf16.mxu0 0
        %659 = vmatpush2.bf16.msra.mxu0 0
        %660 = vmatprep.mubr.bf16.mxu0 0
        %661 = vmatmul.mubr.bf16.gmra.mxu0 %v623
        %v662 = vpop.f32.mrf.mxu0
        %v663 = vadd.f32 0.0, %v662
        %v664 = vpop.f32.mrf.mxu0
        %v665 = vpop.f32.mrf.mxu0
        %v666 = vadd.f32 0.0, %v665
        %v667 = vpop.f32.mrf.mxu0
        %668 = vdwg.mxu0
        %v669 = vpack.c.bf16 %v666, %v663
        %v670 = vld [vmem:[%s6] sm:$0xf]
        %v671 = vld [vmem:[%s6 + $0x4] sm:$0xf]
        %v672 = vld [vmem:[%s6 + $0x8] sm:$0xf]
        %v673 = vld [vmem:[%s6 + $0xc] sm:$0xf]
        %v674 = vld [vmem:[%s7] sm:$0x1]
        %v676 = vlaneseq
        %v677 = vshrl.u32 %v676, 7
        %v678 = vsub.s32 0, %v677
        %v679 = vrot.slane %v674, %v678
        %v685 = vunpack.c.l.b16 %v670
        %v686 = vunpack.c.l.b16 %v671
        %v687 = vunpack.c.l.b16 %v672
        %v688 = vunpack.c.l.b16 %v673
        %v689 = vpack.c.b16 %v686, %v685
        %v690 = vpack.c.b16 %v688, %v687
        %v694 = vsel %vm545, %v669, 0
        %696 = vmatprep.subr.bf16.mxu0 0
        %697 = vmatpush1.bf16.msra.mxu0 0
        %698 = vmatprep.subr.bf16.mxu0 0
        %699 = vmatpush1.bf16.msra.mxu0 0
        %700 = vmatprep.subr.bf16.mxu0 0
        %701 = vmatpush1.bf16.msra.mxu0 0
        %702 = vmatprep.subr.bf16.mxu0 0
        %703 = vmatpush1.bf16.msra.mxu0 0
        %704 = vmatprep.subr.bf16.mxu0 0
        %705 = vmatpush1.bf16.msra.mxu0 0
        %706 = vmatprep.subr.bf16.mxu0 0
        %707 = vmatpush1.bf16.msra.mxu0 0
        %708 = vmatprep.subr.bf16.mxu0 0
        %709 = vmatpush1.bf16.msra.mxu0 %v690
        %710 = vmatprep.subr.bf16.mxu0 0
        %711 = vmatpush1.bf16.msra.mxu0 %v689
        %712 = vmatprep.subr.bf16.mxu0 0
        %713 = vmatpush2.bf16.msra.mxu0 0
        %714 = vmatprep.subr.bf16.mxu0 0
        %715 = vmatpush2.bf16.msra.mxu0 0
        %716 = vmatprep.subr.bf16.mxu0 0
        %717 = vmatpush2.bf16.msra.mxu0 0
        %718 = vmatprep.subr.bf16.mxu0 0
        %719 = vmatpush2.bf16.msra.mxu0 0
        %720 = vmatprep.subr.bf16.mxu0 0
        %721 = vmatpush2.bf16.msra.mxu0 0
        %722 = vmatprep.subr.bf16.mxu0 0
        %723 = vmatpush2.bf16.msra.mxu0 0
        %724 = vmatprep.subr.bf16.mxu0 0
        %725 = vmatpush2.bf16.msra.mxu0 0
        %726 = vmatprep.subr.bf16.mxu0 0
        %727 = vmatpush2.bf16.msra.mxu0 0
        %728 = vmatprep.mubr.bf16.mxu0 0
        %729 = vmatmul.mubr.bf16.gmra.mxu0 %v694
        %v730 = vpop.f32.mrf.mxu0
        %v731 = vadd.f32 %v679, %v730
        %v732 = vpop.f32.mrf.mxu0
        %v733 = vpop.f32.mrf.mxu0
        %v734 = vadd.f32 %v679, %v733
        %v735 = vpop.f32.mrf.mxu0
        %736 = vdwg.mxu0
        %737 = vxpose.xlu0.b32.start [1/16] %v731, 128
        %738 = vxpose.xlu0.b32.cont [2/16] %v734, 128
        %739 = vxpose.xlu0.b32.cont [3/16] 0.0, 128
        %740 = vxpose.xlu0.b32.cont [4/16] 0.0, 128
        %741 = vxpose.xlu0.b32.cont [5/16] 0.0, 128
        %742 = vxpose.xlu0.b32.cont [6/16] 0.0, 128
        %743 = vxpose.xlu0.b32.cont [7/16] 0.0, 128
        %744 = vxpose.xlu0.b32.cont [8/16] 0.0, 128
        %745 = vxpose.xlu0.b32.cont [9/16] 0.0, 128
        %746 = vxpose.xlu0.b32.cont [10/16] 0.0, 128
        %747 = vxpose.xlu0.b32.cont [11/16] 0.0, 128
        %748 = vxpose.xlu0.b32.cont [12/16] 0.0, 128
        %749 = vxpose.xlu0.b32.cont [13/16] 0.0, 128
        %750 = vxpose.xlu0.b32.cont [14/16] 0.0, 128
        %751 = vxpose.xlu0.b32.cont [15/16] 0.0, 128
        %752 = vxpose.xlu0.b32.end [16/16] 0.0, 128
        %v753 = vpop.trf.xlu0
        %v754 = vpop.trf.xlu0
        %v755 = vpop.trf.xlu0
        %v756 = vpop.trf.xlu0
        %v757 = vpop.trf.xlu0
        %v758 = vpop.trf.xlu0
        %v759 = vpop.trf.xlu0
        %v760 = vpop.trf.xlu0
        %v761 = vpop.trf.xlu0
        %v762 = vpop.trf.xlu0
        %v763 = vpop.trf.xlu0
        %v764 = vpop.trf.xlu0
        %v765 = vpop.trf.xlu0
        %v766 = vpop.trf.xlu0
        %v767 = vpop.trf.xlu0
        %v768 = vpop.trf.xlu0
        %vm769 = vcmask 130048
        %770 = vst.msk [vmem:[%s377] sm:$0xff] %vm769, %v753
        %771 = vst.msk [vmem:[%s377 + $0x8] sm:$0xff] %vm769, %v754
        %772 = vst.msk [vmem:[%s377 + $0x10] sm:$0xff] %vm769, %v755
        %773 = vst.msk [vmem:[%s377 + $0x18] sm:$0xff] %vm769, %v756
        %774 = vst.msk [vmem:[%s382] sm:$0xff] %vm593, %v616
        %775 = vst.msk [vmem:[%s382 + $0x8] sm:$0xff] %vm593, %v617
        %p776 = scmp.lt.s32.totalorder %s24, 1
        %s777 = scalar_select %p776, %s24, 1
        %s778 = smul.addr %s777, 4
        %s779 = smul.addr %s778, 8
        %s780 = scalar_lea.vmem %s8, %s779
        %p781 = scmp.lt.s32.totalorder %s24, 1
        %s782 = scalar_select %p781, %s24, 1
        %s783 = smul.addr %s782, 2
        %s784 = smul.addr %s783, 8
        %s785 = scalar_lea.vmem %s9, %s784
        // Predicated region
        $region57: #{tpu_custom_call.1} parent=51 // pred_check
          %p786 = pneg %p220
        $region58: #{tpu_custom_call.1} parent=51 // pred_check_branch
          %788 = sbr.rel (%p786) target = $region60
        $region59: #{tpu_custom_call.1} parent=51 // pred_region
          _
        $region60: #{tpu_custom_call.1} parent=51 // pred_fallthru
          _
        // Predicated region
        $region61: #{tpu_custom_call.1} parent=51 // pred_check
          %p789 = pneg %p246
        $region62: #{tpu_custom_call.1} parent=51 // pred_check_branch
          %791 = sbr.rel (%p789) target = $region64
        $region63: #{tpu_custom_call.1} parent=51 // pred_region
          _
        $region64: #{tpu_custom_call.1} parent=51 // pred_fallthru
          _
      $region52: #{tpu_custom_call.1} parent=5 // pred_fallthru
        _
      %p792 = scmp.le.s32.totalorder 2, %s19
      // Predicated region
      $region65: #{tpu_custom_call.1} parent=5 // pred_check
        %p793 = pneg %p792
      $region66: #{tpu_custom_call.1} parent=5 // pred_check_branch
        %795 = sbr.rel (%p793) target = $region68
      $region67: #{tpu_custom_call.1} parent=5 // pred_region
        %s796 = ssub.s32 %s19, 2
        // Predicated region
        $region69: #{tpu_custom_call.1} parent=67 // pred_check
          %p797 = pneg %p226
        $region70: #{tpu_custom_call.1} parent=67 // pred_check_branch
          %799 = sbr.rel (%p797) target = $region72
        $region71: #{tpu_custom_call.1} parent=67 // pred_region
          %p800 = scmp.lt.s32.totalorder %s25, 1
          %s801 = scalar_select %p800, %s25, 1
          %s802 = smul.addr %s801, 4
          %s803 = smul.addr %s802, 8
          %s804 = scalar_lea.vmem %s8, %s803
        $region72: #{tpu_custom_call.1} parent=67 // pred_fallthru
          _
        // Predicated region
        $region73: #{tpu_custom_call.1} parent=67 // pred_check
          %p805 = pneg %p252
        $region74: #{tpu_custom_call.1} parent=67 // pred_check_branch
          %807 = sbr.rel (%p805) target = $region76
        $region75: #{tpu_custom_call.1} parent=67 // pred_region
          %p808 = scmp.lt.s32.totalorder %s25, 1
          %s809 = scalar_select %p808, %s25, 1
          %s810 = smul.addr %s809, 2
          %s811 = smul.addr %s810, 8
          %s812 = scalar_lea.vmem %s9, %s811
        $region76: #{tpu_custom_call.1} parent=67 // pred_fallthru
          _
      $region68: #{tpu_custom_call.1} parent=5 // pred_fallthru
        _
    $region6: #{tpu_custom_call.1} parent=1 // loop_footer
      %s23 = sadd.s32 1, %s19
    $region7: #{tpu_custom_call.1} parent=1 // loop_footer_branch
      %18 = sbr.rel target = $region3
    $region8: #{tpu_custom_call.1} parent=1 // loop_exit
      _
    %813 = vsyncpa [#allocation3], 1
    %s814 = scalar_lea.sflag [#allocation3], 1
    %815 = vsyncpa %s814, 1

// kernel: tpu_custom_call.1
$region0: #{tpu_custom_call.1}
  #allocation0 [shape = 'u32[]', space=smem, size = 0x4, offset = 0x4, fixed_abs, tag = 'smem constant byte address 0x4 - core index']
  #allocation1 [shape = 'u32[144,128]{1,0:T(1,128)}', space=vmem, size = 0x12000, scoped, tag = 'internal scratch']
  %s0 = inlined_call_operand.vmem [shape: bf16[2,16,64], index: 0, kind: input, shape index: {}]
  %s1 = inlined_call_operand.hbm [shape: bf16[2,8,24], index: 1, kind: input, shape index: {}]
  %s2 = inlined_call_operand.vmem [shape: bf16[64,32], index: 2, kind: input, shape index: {}]
  %s3 = inlined_call_operand.vmem [shape: f32[1,32], index: 3, kind: input, shape index: {}]
  %s4 = inlined_call_operand.vmem [shape: bf16[24,64], index: 4, kind: input, shape index: {}]
  %s5 = inlined_call_operand.vmem [shape: f32[1,64], index: 5, kind: input, shape index: {}]
  %s6 = inlined_call_operand.vmem [shape: bf16[32,32], index: 6, kind: input, shape index: {}]
  %s7 = inlined_call_operand.vmem [shape: f32[1,32], index: 7, kind: input, shape index: {}]
  %s8 = inlined_call_operand.hbm [shape: f32[2,16,32], index: 8, kind: output, shape index: {0}]
  %s9 = inlined_call_operand.vmem [shape: f32[2,16,8], index: 9, kind: output, shape index: {1}]
  %10 = xla_tuple %s8, %s9
  %s11 = sld [smem:[#allocation0]]
  $region77: #{tpu_custom_call.1} parent=0
    _
  %s13 = ssub.s32 1, %s11
  %s14 = scalar_select 0, %s13, %s11
  $region1: #{tpu_custom_call.1} parent=0
    #allocation2 [shape = 'u8[4096]{0}', space=vmem, size = 0x1000, scoped, tag = 'input window, operand 1']
    #allocation3 [shape = 's32[2]{0}', space=sflag, size = 0x8, scoped, tag = 'scoped memory for tpu_custom_call.1']
    #allocation4 [shape = 's32[2]{0}', space=sflag, size = 0x8, scoped, tag = 'scoped memory for tpu_custom_call.1']
    #allocation5 [shape = 'u8[16384]{0}', space=vmem, size = 0x4000, scoped, tag = 'output window, operand 0']
    %15 = vsyncpa [#allocation3], 0
    %s16 = scalar_lea.sflag [#allocation3], 1
    %17 = vsyncpa %s16, 0
    %18 = vsyncpa [#allocation4], 0
    %s19 = scalar_lea.sflag [#allocation4], 1
    %20 = vsyncpa %s19, 0
    loop: start=0, step=1, limit=4
    $region2: #{tpu_custom_call.1} parent=1 // loop_pre_header
      _
    $region3: #{tpu_custom_call.1} parent=1 // loop_header
      %s22 = sphi 0, %s26
      %p23 = scmp.ge.s32.totalorder %s22, 4
      %s32 = sphi 0, %s34
      %s35 = sphi 0, %s32
      %s36 = sphi 0, %s35
      %s52 = sphi 0, %s36
      %s58 = sphi 0, %s60
      %s61 = sphi 0, %s58
      %s62 = sphi 0, %s61
      %s78 = sphi 0, %s62
      %s82 = sphi 0, %s82
      %s84 = sphi 0, %s82
      %s85 = sphi 0, %s84
      %s99 = sphi 0, %s85
      %s103 = sphi 0, %s103
      %s105 = sphi 0, %s103
      %s106 = sphi 0, %s105
      %s120 = sphi 0, %s106
      %s124 = sphi 0, %s124
      %s126 = sphi 0, %s124
      %s127 = sphi 0, %s126
      %s141 = sphi 0, %s127
      %s145 = sphi 0, %s145
      %s147 = sphi 0, %s145
      %s148 = sphi 0, %s147
      %s162 = sphi 0, %s148
      %s166 = sphi 0, %s166
      %s168 = sphi 0, %s166
      %s169 = sphi 0, %s168
      %s183 = sphi 0, %s169
      %s187 = sphi 0, %s187
      %s189 = sphi 0, %s187
      %s190 = sphi 0, %s189
      %s204 = sphi 0, %s190
      %s210 = sphi 0, %s212
      %s213 = sphi 0, %s210
      %s214 = sphi 0, %s213
      %s230 = sphi 0, %s214
      %s236 = sphi 0, %s238
      %s239 = sphi 0, %s236
      %s240 = sphi 0, %s239
      %s256 = sphi 0, %s240
    $region4: #{tpu_custom_call.1} parent=1 // loop_header_branch
      %25 = sbr.rel (%p23) target = $region8
    $region5: #{tpu_custom_call.1} parent=1 // loop_body
      %s27 = ssub.s32 %s22, 1
      %s28 = ssub.s32 %s22, 2
      %s29 = sadd.s32 %s22, 1
      %s30 = ssub.s32 %s22, %s29
      %p31 = scmp.eq.s32.totalorder %s30, 0
      %s33 = sadd.s32 %s32, 1
      %s34 = scalar_select %p31, %s32, %s33
      %p37 = pneg %p31
      %p38 = scmp.eq.s32.totalorder %s22, 1
      %p39 = por %p37, %p38
      %p40 = scmp.ne.s32.totalorder %s32, %s35
      %p41 = scmp.eq.s32.totalorder %s22, 0
      %p42 = por %p40, %p41
      %p43 = scmp.ne.s32.totalorder %s32, %s35
      %p44 = scmp.eq.s32.totalorder %s27, 1
      %p45 = por %p43, %p44
      %p46 = scmp.ne.s32.totalorder %s35, %s36
      %p47 = scmp.eq.s32.totalorder %s27, 0
      %p48 = por %p46, %p47
      %p49 = scmp.ne.s32.totalorder %s35, %s36
      %p50 = scmp.eq.s32.totalorder %s28, 1
      %p51 = por %p49, %p50
      %p53 = scmp.ne.s32.totalorder %s36, %s52
      %p54 = scmp.eq.s32.totalorder %s28, 0
      %p55 = por %p53, %p54
      %s56 = ssub.s32 %s22, %s29
      %p57 = scmp.eq.s32.totalorder %s56, 0
      %s59 = sadd.s32 %s58, 1
      %s60 = scalar_select %p57, %s58, %s59
      %p63 = pneg %p57
      %p64 = scmp.eq.s32.totalorder %s22, 1
      %p65 = por %p63, %p64
      %p66 = scmp.ne.s32.totalorder %s58, %s61
      %p67 = scmp.eq.s32.totalorder %s22, 0
      %p68 = por %p66, %p67
      %p69 = scmp.ne.s32.totalorder %s58, %s61
      %p70 = scmp.eq.s32.totalorder %s27, 1
      %p71 = por %p69, %p70
      %p72 = scmp.ne.s32.totalorder %s61, %s62
      %p73 = scmp.eq.s32.totalorder %s27, 0
      %p74 = por %p72, %p73
      %p75 = scmp.ne.s32.totalorder %s61, %s62
      %p76 = scmp.eq.s32.totalorder %s28, 1
      %p77 = por %p75, %p76
      %p79 = scmp.ne.s32.totalorder %s62, %s78
      %p80 = scmp.eq.s32.totalorder %s28, 0
      %p81 = por %p79, %p80
      %s83 = sadd.s32 %s82, 1
      %p86 = scmp.eq.s32.totalorder %s22, 1
      %p87 = scmp.ne.s32.totalorder %s82, %s84
      %p88 = scmp.eq.s32.totalorder %s22, 0
      %p89 = por %p87, %p88
      %p90 = scmp.ne.s32.totalorder %s82, %s84
      %p91 = scmp.eq.s32.totalorder %s27, 1
      %p92 = por %p90, %p91
      %p93 = scmp.ne.s32.totalorder %s84, %s85
      %p94 = scmp.eq.s32.totalorder %s27, 0
      %p95 = por %p93, %p94
      %p96 = scmp.ne.s32.totalorder %s84, %s85
      %p97 = scmp.eq.s32.totalorder %s28, 1
      %p98 = por %p96, %p97
      %p100 = scmp.ne.s32.totalorder %s85, %s99
      %p101 = scmp.eq.s32.totalorder %s28, 0
      %p102 = por %p100, %p101
      %s104 = sadd.s32 %s103, 1
      %p107 = scmp.eq.s32.totalorder %s22, 1
      %p108 = scmp.ne.s32.totalorder %s103, %s105
      %p109 = scmp.eq.s32.totalorder %s22, 0
      %p110 = por %p108, %p109
      %p111 = scmp.ne.s32.totalorder %s103, %s105
      %p112 = scmp.eq.s32.totalorder %s27, 1
      %p113 = por %p111, %p112
      %p114 = scmp.ne.s32.totalorder %s105, %s106
      %p115 = scmp.eq.s32.totalorder %s27, 0
      %p116 = por %p114, %p115
      %p117 = scmp.ne.s32.totalorder %s105, %s106
      %p118 = scmp.eq.s32.totalorder %s28, 1
      %p119 = por %p117, %p118
      %p121 = scmp.ne.s32.totalorder %s106, %s120
      %p122 = scmp.eq.s32.totalorder %s28, 0
      %p123 = por %p121, %p122
      %s125 = sadd.s32 %s124, 1
      %p128 = scmp.eq.s32.totalorder %s22, 1
      %p129 = scmp.ne.s32.totalorder %s124, %s126
      %p130 = scmp.eq.s32.totalorder %s22, 0
      %p131 = por %p129, %p130
      %p132 = scmp.ne.s32.totalorder %s124, %s126
      %p133 = scmp.eq.s32.totalorder %s27, 1
      %p134 = por %p132, %p133
      %p135 = scmp.ne.s32.totalorder %s126, %s127
      %p136 = scmp.eq.s32.totalorder %s27, 0
      %p137 = por %p135, %p136
      %p138 = scmp.ne.s32.totalorder %s126, %s127
      %p139 = scmp.eq.s32.totalorder %s28, 1
      %p140 = por %p138, %p139
      %p142 = scmp.ne.s32.totalorder %s127, %s141
      %p143 = scmp.eq.s32.totalorder %s28, 0
      %p144 = por %p142, %p143
      %s146 = sadd.s32 %s145, 1
      %p149 = scmp.eq.s32.totalorder %s22, 1
      %p150 = scmp.ne.s32.totalorder %s145, %s147
      %p151 = scmp.eq.s32.totalorder %s22, 0
      %p152 = por %p150, %p151
      %p153 = scmp.ne.s32.totalorder %s145, %s147
      %p154 = scmp.eq.s32.totalorder %s27, 1
      %p155 = por %p153, %p154
      %p156 = scmp.ne.s32.totalorder %s147, %s148
      %p157 = scmp.eq.s32.totalorder %s27, 0
      %p158 = por %p156, %p157
      %p159 = scmp.ne.s32.totalorder %s147, %s148
      %p160 = scmp.eq.s32.totalorder %s28, 1
      %p161 = por %p159, %p160
      %p163 = scmp.ne.s32.totalorder %s148, %s162
      %p164 = scmp.eq.s32.totalorder %s28, 0
      %p165 = por %p163, %p164
      %s167 = sadd.s32 %s166, 1
      %p170 = scmp.eq.s32.totalorder %s22, 1
      %p171 = scmp.ne.s32.totalorder %s166, %s168
      %p172 = scmp.eq.s32.totalorder %s22, 0
      %p173 = por %p171, %p172
      %p174 = scmp.ne.s32.totalorder %s166, %s168
      %p175 = scmp.eq.s32.totalorder %s27, 1
      %p176 = por %p174, %p175
      %p177 = scmp.ne.s32.totalorder %s168, %s169
      %p178 = scmp.eq.s32.totalorder %s27, 0
      %p179 = por %p177, %p178
      %p180 = scmp.ne.s32.totalorder %s168, %s169
      %p181 = scmp.eq.s32.totalorder %s28, 1
      %p182 = por %p180, %p181
      %p184 = scmp.ne.s32.totalorder %s169, %s183
      %p185 = scmp.eq.s32.totalorder %s28, 0
      %p186 = por %p184, %p185
      %s188 = sadd.s32 %s187, 1
      %p191 = scmp.eq.s32.totalorder %s22, 1
      %p192 = scmp.ne.s32.totalorder %s187, %s189
      %p193 = scmp.eq.s32.totalorder %s22, 0
      %p194 = por %p192, %p193
      %p195 = scmp.ne.s32.totalorder %s187, %s189
      %p196 = scmp.eq.s32.totalorder %s27, 1
      %p197 = por %p195, %p196
      %p198 = scmp.ne.s32.totalorder %s189, %s190
      %p199 = scmp.eq.s32.totalorder %s27, 0
      %p200 = por %p198, %p199
      %p201 = scmp.ne.s32.totalorder %s189, %s190
      %p202 = scmp.eq.s32.totalorder %s28, 1
      %p203 = por %p201, %p202
      %p205 = scmp.ne.s32.totalorder %s190, %s204
      %p206 = scmp.eq.s32.totalorder %s28, 0
      %p207 = por %p205, %p206
      %s208 = ssub.s32 %s22, %s29
      %p209 = scmp.eq.s32.totalorder %s208, 0
      %s211 = sadd.s32 %s210, 1
      %s212 = scalar_select %p209, %s210, %s211
      %p215 = pneg %p209
      %p216 = scmp.eq.s32.totalorder %s22, 1
      %p217 = por %p215, %p216
      %p218 = scmp.ne.s32.totalorder %s210, %s213
      %p219 = scmp.eq.s32.totalorder %s22, 0
      %p220 = por %p218, %p219
      %p221 = scmp.ne.s32.totalorder %s210, %s213
      %p222 = scmp.eq.s32.totalorder %s27, 1
      %p223 = por %p221, %p222
      %p224 = scmp.ne.s32.totalorder %s213, %s214
      %p225 = scmp.eq.s32.totalorder %s27, 0
      %p226 = por %p224, %p225
      %p227 = scmp.ne.s32.totalorder %s213, %s214
      %p228 = scmp.eq.s32.totalorder %s28, 1
      %p229 = por %p227, %p228
      %p231 = scmp.ne.s32.totalorder %s214, %s230
      %p232 = scmp.eq.s32.totalorder %s28, 0
      %p233 = por %p231, %p232
      %s234 = ssub.s32 %s22, %s29
      %p235 = scmp.eq.s32.totalorder %s234, 0
      %s237 = sadd.s32 %s236, 1
      %s238 = scalar_select %p235, %s236, %s237
      %p241 = pneg %p235
      %p242 = scmp.eq.s32.totalorder %s22, 1
      %p243 = por %p241, %p242
      %p244 = scmp.ne.s32.totalorder %s236, %s239
      %p245 = scmp.eq.s32.totalorder %s22, 0
      %p246 = por %p244, %p245
      %p247 = scmp.ne.s32.totalorder %s236, %s239
      %p248 = scmp.eq.s32.totalorder %s27, 1
      %p249 = por %p247, %p248
      %p250 = scmp.ne.s32.totalorder %s239, %s240
      %p251 = scmp.eq.s32.totalorder %s27, 0
      %p252 = por %p250, %p251
      %p253 = scmp.ne.s32.totalorder %s239, %s240
      %p254 = scmp.eq.s32.totalorder %s28, 1
      %p255 = por %p253, %p254
      %p257 = scmp.ne.s32.totalorder %s240, %s256
      %p258 = scmp.eq.s32.totalorder %s28, 0
      %p259 = por %p257, %p258
      %p260 = scmp.le.s32.totalorder 1, %s22
      %p261 = scmp.lt.s32.totalorder %s22, 3
      %p262 = pnand %p260, %p261
      %p263 = pneg %p262
      // Predicated region
      $region9: #{tpu_custom_call.1} parent=5 // pred_check
        _
      $region10: #{tpu_custom_call.1} parent=5 // pred_check_branch
        %265 = sbr.rel (%p262) target = $region12
      $region11: #{tpu_custom_call.1} parent=5 // pred_region
        %s266 = ssub.s32 %s22, 1
        // Predicated region
        $region13: #{tpu_custom_call.1} parent=11 // pred_check
          %p267 = pneg %p95
        $region14: #{tpu_custom_call.1} parent=11 // pred_check_branch
          %269 = sbr.rel (%p267) target = $region16
        $region15: #{tpu_custom_call.1} parent=11 // pred_region
          _
        $region16: #{tpu_custom_call.1} parent=11 // pred_fallthru
          _
        // Predicated region
        $region17: #{tpu_custom_call.1} parent=11 // pred_check
          %p270 = pneg %p116
        $region18: #{tpu_custom_call.1} parent=11 // pred_check_branch
          %272 = sbr.rel (%p270) target = $region20
        $region19: #{tpu_custom_call.1} parent=11 // pred_region
          _
        $region20: #{tpu_custom_call.1} parent=11 // pred_fallthru
          _
        // Predicated region
        $region21: #{tpu_custom_call.1} parent=11 // pred_check
          %p273 = pneg %p137
        $region22: #{tpu_custom_call.1} parent=11 // pred_check_branch
          %275 = sbr.rel (%p273) target = $region24
        $region23: #{tpu_custom_call.1} parent=11 // pred_region
          _
        $region24: #{tpu_custom_call.1} parent=11 // pred_fallthru
          _
        // Predicated region
        $region25: #{tpu_custom_call.1} parent=11 // pred_check
          %p276 = pneg %p158
        $region26: #{tpu_custom_call.1} parent=11 // pred_check_branch
          %278 = sbr.rel (%p276) target = $region28
        $region27: #{tpu_custom_call.1} parent=11 // pred_region
          _
        $region28: #{tpu_custom_call.1} parent=11 // pred_fallthru
          _
        // Predicated region
        $region29: #{tpu_custom_call.1} parent=11 // pred_check
          %p279 = pneg %p179
        $region30: #{tpu_custom_call.1} parent=11 // pred_check_branch
          %281 = sbr.rel (%p279) target = $region32
        $region31: #{tpu_custom_call.1} parent=11 // pred_region
          _
        $region32: #{tpu_custom_call.1} parent=11 // pred_fallthru
          _
        // Predicated region
        $region33: #{tpu_custom_call.1} parent=11 // pred_check
          %p282 = pneg %p200
        $region34: #{tpu_custom_call.1} parent=11 // pred_check_branch
          %284 = sbr.rel (%p282) target = $region36
        $region35: #{tpu_custom_call.1} parent=11 // pred_region
          _
        $region36: #{tpu_custom_call.1} parent=11 // pred_fallthru
          _
      $region12: #{tpu_custom_call.1} parent=5 // pred_fallthru
        _
      %p285 = scmp.lt.s32.totalorder %s22, 2
      // Predicated region
      $region37: #{tpu_custom_call.1} parent=5 // pred_check
        %p286 = pneg %p285
      $region38: #{tpu_custom_call.1} parent=5 // pred_check_branch
        %288 = sbr.rel (%p286) target = $region40
      $region39: #{tpu_custom_call.1} parent=5 // pred_region
        // Predicated region
        $region41: #{tpu_custom_call.1} parent=39 // pred_check
          %p289 = pneg %p42
        $region42: #{tpu_custom_call.1} parent=39 // pred_check_branch
          %291 = sbr.rel (%p289) target = $region44
        $region43: #{tpu_custom_call.1} parent=39 // pred_region
          %p292 = scmp.lt.s32.totalorder %s22, 1
          %s293 = scalar_select %p292, %s22, 1
          %s294 = smul.addr %s293, 2
          %s295 = smul.addr %s294, 4
          %s296 = scalar_lea.vmem %s0, %s295
        $region44: #{tpu_custom_call.1} parent=39 // pred_fallthru
          _
        // Predicated region
        $region45: #{tpu_custom_call.1} parent=39 // pred_check
          %p297 = pneg %p68
        $region46: #{tpu_custom_call.1} parent=39 // pred_check_branch
          %299 = sbr.rel (%p297) target = $region48
        $region47: #{tpu_custom_call.1} parent=39 // pred_region
          %s300 = sand.u32 %s58, 1
          %s301 = scalar_lea.sflag [#allocation3], %s300
          %s302 = sand.u32 %s58, 1
          %s303 = smul.addr %s302, 4
          %s304 = scalar_lea.vmem [#allocation2], %s303
          %s306 = ssub.s32 64, 64
          %307 = vsyncadd %s301, %s306
          %s308 = smul.addr %s22, 64
          %s309 = scalar_lea.hbm %s1, %s308
          %s311 = sshll.u32 %s304, 4
          %s312 = int_to_ptr.vmem [resolvable:$true] %s311
          %314 = dma.hbm_to_vmem [thread:$0]  %s309, 64, %s312, %s301
        $region48: #{tpu_custom_call.1} parent=39 // pred_fallthru
          _
      $region40: #{tpu_custom_call.1} parent=5 // pred_fallthru
        _
      %p315 = scmp.le.s32.totalorder 1, %s22
      %p316 = scmp.lt.s32.totalorder %s22, 3
      %p317 = pnand %p315, %p316
      %p318 = pneg %p317
      // Predicated region
      $region49: #{tpu_custom_call.1} parent=5 // pred_check
        _
      $region50: #{tpu_custom_call.1} parent=5 // pred_check_branch
        %320 = sbr.rel (%p317) target = $region52
      $region51: #{tpu_custom_call.1} parent=5 // pred_region
        %s321 = ssub.s32 %s22, 1
        %s322 = sand.u32 %s61, 1
        %s323 = scalar_lea.sflag [#allocation3], %s322
        %s324 = sand.u32 %s61, 1
        %s325 = smul.addr %s324, 4
        %s326 = scalar_lea.vmem [#allocation2], %s325
        // Predicated region
        $region53: #{tpu_custom_call.1} parent=51 // pred_check
          %p327 = pneg %p74
        $region54: #{tpu_custom_call.1} parent=51 // pred_check_branch
          %329 = sbr.rel (%p327) target = $region56
        $region55: #{tpu_custom_call.1} parent=51 // pred_region
          %330 = dma.done %s323, 64
        $region56: #{tpu_custom_call.1} parent=51 // pred_fallthru
          _
        %p331 = scmp.lt.s32.totalorder %s27, 1
        %s332 = scalar_select %p331, %s27, 1
        %s333 = smul.addr %s332, 2
        %s334 = smul.addr %s333, 4
        %s335 = scalar_lea.vmem %s0, %s334
        %p336 = pneg %p48
        %p337 = pneg %p45
        %s338 = sand.u32 %s61, 1
        %s339 = scalar_lea.sflag [#allocation3], %s338
        %s340 = sand.u32 %s61, 1
        %s341 = smul.addr %s340, 4
        %s342 = scalar_lea.vmem [#allocation2], %s341
        %p343 = pneg %p74
        %p344 = pneg %p71
        %p345 = pneg %p95
        %p346 = pneg %p92
        %p347 = pneg %p116
        %p348 = pneg %p113
        %p349 = pneg %p137
        %p350 = pneg %p134
        %p351 = pneg %p158
        %p352 = pneg %p155
        %p353 = pneg %p179
        %p354 = pneg %p176
        %p355 = pneg %p200
        %p356 = pneg %p197
        %p357 = pneg %p226
        %p358 = pneg %p223
        %s359 = sand.u32 %s213, 1
        %s360 = scalar_lea.sflag [#allocation4], %s359
        %s361 = sand.u32 %s213, 1
        %s362 = smul.addr %s361, 16
        %s363 = scalar_lea.vmem [#allocation5], %s362
        %p364 = pneg %p252
        %p365 = pneg %p249
        %p366 = scmp.lt.s32.totalorder %s27, 1
        %s367 = scalar_select %p366, %s27, 1
        %s368 = smul.addr %s367, 2
        %s369 = smul.addr %s368, 8
        %s370 = scalar_lea.vmem %s9, %s369
        %p371 = scmp.lt.s32.totalorder %s27, 1
        %s372 = scalar_select %p371, %s27, 1
        %s373 = smul.addr %s372, 2
        %s374 = smul.addr %s373, 4
        %s375 = scalar_lea.vmem %s0, %s374
        %p376 = scmp.lt.s32.totalorder %s27, 1
        %s377 = scalar_select %p376, %s27, 1
        %s378 = smul.addr %s377, 2
        %s379 = smul.addr %s378, 8
        %s380 = scalar_lea.vmem %s9, %s379
        %v382 = vld [vmem:[%s375] sm:$0xf]
        %v383 = vld [vmem:[%s375 + $0x4] sm:$0xf]
        %v384 = vld [vmem:[%s326] sm:$0xf]
        %v385 = vld [vmem:[%s2] sm:$0xf]
        %v386 = vld [vmem:[%s2 + $0x4] sm:$0xf]
        %v387 = vld [vmem:[%s2 + $0x8] sm:$0xf]
        %v388 = vld [vmem:[%s2 + $0xc] sm:$0xf]
        %v389 = vld [vmem:[%s2 + $0x10] sm:$0xf]
        %v390 = vld [vmem:[%s2 + $0x14] sm:$0xf]
        %v391 = vld [vmem:[%s2 + $0x18] sm:$0xf]
        %v392 = vld [vmem:[%s2 + $0x1c] sm:$0xf]
        %v393 = vld [vmem:[%s3] sm:$0x1]
        %v395 = vlaneseq
        %v396 = vshrl.u32 %v395, 7
        %v397 = vsub.s32 0, %v396
        %v398 = vrot.slane %v393, %v397
        %v402 = vunpack.c.l.b16 %v382
        %v403 = vunpack.c.l.b16 %v383
        %v404 = vpack.c.b16 %v403, %v402
        %v413 = vunpack.c.l.b16 %v385
        %v414 = vunpack.c.l.b16 %v386
        %v415 = vunpack.c.l.b16 %v387
        %v416 = vunpack.c.l.b16 %v388
        %v417 = vunpack.c.l.b16 %v389
        %v418 = vunpack.c.l.b16 %v390
        %v419 = vunpack.c.l.b16 %v391
        %v420 = vunpack.c.l.b16 %v392
        %v421 = vpack.c.b16 %v414, %v413
        %v422 = vpack.c.b16 %v416, %v415
        %v423 = vpack.c.b16 %v418, %v417
        %v424 = vpack.c.b16 %v420, %v419
        %vm429 = vcmask 523264
        %v431 = vsel %vm429, %v404, 0
        %433 = vmatprep.subr.bf16.mxu0 0
        %434 = vmatpush1.bf16.msra.mxu0 0
        %435 = vmatprep.subr.bf16.mxu0 0
        %436 = vmatpush1.bf16.msra.mxu0 0
        %437 = vmatprep.subr.bf16.mxu0 0
        %438 = vmatpush1.bf16.msra.mxu0 0
        %439 = vmatprep.subr.bf16.mxu0 0
        %440 = vmatpush1.bf16.msra.mxu0 0
        %441 = vmatprep.subr.bf16.mxu0 0
        %442 = vmatpush1.bf16.msra.mxu0 %v424
        %443 = vmatprep.subr.bf16.mxu0 0
        %444 = vmatpush1.bf16.msra.mxu0 %v423
        %445 = vmatprep.subr.bf16.mxu0 0
        %446 = vmatpush1.bf16.msra.mxu0 %v422
        %447 = vmatprep.subr.bf16.mxu0 0
        %448 = vmatpush1.bf16.msra.mxu0 %v421
        %449 = vmatprep.subr.bf16.mxu0 0
        %450 = vmatpush2.bf16.msra.mxu0 0
        %451 = vmatprep.subr.bf16.mxu0 0
        %452 = vmatpush2.bf16.msra.mxu0 0
        %453 = vmatprep.subr.bf16.mxu0 0
        %454 = vmatpush2.bf16.msra.mxu0 0
        %455 = vmatprep.subr.bf16.mxu0 0
        %456 = vmatpush2.bf16.msra.mxu0 0
        %457 = vmatprep.subr.bf16.mxu0 0
        %458 = vmatpush2.bf16.msra.mxu0 0
        %459 = vmatprep.subr.bf16.mxu0 0
        %460 = vmatpush2.bf16.msra.mxu0 0
        %461 = vmatprep.subr.bf16.mxu0 0
        %462 = vmatpush2.bf16.msra.mxu0 0
        %463 = vmatprep.subr.bf16.mxu0 0
        %464 = vmatpush2.bf16.msra.mxu0 0
        %465 = vmatprep.mubr.bf16.mxu0 0
        %466 = vmatmul.mubr.bf16.gmra.mxu0 %v431
        %v467 = vpop.f32.mrf.mxu0
        %v468 = vadd.f32 %v398, %v467
        %v469 = vpop.f32.mrf.mxu0
        %v470 = vpop.f32.mrf.mxu0
        %v471 = vadd.f32 %v398, %v470
        %v472 = vpop.f32.mrf.mxu0
        %473 = vdwg.mxu0
        %v474 = vld [vmem:[%s4] sm:$0xf]
        %v475 = vld [vmem:[%s4 + $0x4] sm:$0xf]
        %v476 = vld [vmem:[%s4 + $0x8] sm:$0xf]
        %v477 = vld [vmem:[%s5] sm:$0x1]
        %v479 = vlaneseq
        %v480 = vshrl.u32 %v479, 7
        %v481 = vsub.s32 0, %v480
        %v482 = vrot.slane %v477, %v481
        %v487 = vunpack.c.l.b16 %v474
        %v488 = vunpack.c.l.b16 %v475
        %v489 = vunpack.c.l.b16 %v476
        %v490 = vpack.c.b16 %v488, %v487
        %v491 = vpack.c.b16 %v489, %v489
        %vm493 = vcmask 195584
        %v495 = vsel %vm493, %v384, 0
        %vm497 = vcmask 1043456
        %v499 = vsel %vm497, %v491, 0
        %501 = vmatprep.subr.bf16.mxu0 0
        %502 = vmatpush1.bf16.msra.mxu0 0
        %503 = vmatprep.subr.bf16.mxu0 0
        %504 = vmatpush1.bf16.msra.mxu0 0
        %505 = vmatprep.subr.bf16.mxu0 0
        %506 = vmatpush1.bf16.msra.mxu0 0
        %507 = vmatprep.subr.bf16.mxu0 0
        %508 = vmatpush1.bf16.msra.mxu0 0
        %509 = vmatprep.subr.bf16.mxu0 0
        %510 = vmatpush1.bf16.msra.mxu0 0
        %511 = vmatprep.subr.bf16.mxu0 0
        %512 = vmatpush1.bf16.msra.mxu0 0
        %513 = vmatprep.subr.bf16.mxu0 0
        %514 = vmatpush1.bf16.msra.mxu0 %v499
        %515 = vmatprep.subr.bf16.mxu0 0
        %516 = vmatpush1.bf16.msra.mxu0 %v490
        %517 = vmatprep.subr.bf16.mxu0 0
        %518 = vmatpush2.bf16.msra.mxu0 0
        %519 = vmatprep.subr.bf16.mxu0 0
        %520 = vmatpush2.bf16.msra.mxu0 0
        %521 = vmatprep.subr.bf16.mxu0 0
        %522 = vmatpush2.bf16.msra.mxu0 0
        %523 = vmatprep.subr.bf16.mxu0 0
        %524 = vmatpush2.bf16.msra.mxu0 0
        %525 = vmatprep.subr.bf16.mxu0 0
        %526 = vmatpush2.bf16.msra.mxu0 0
        %527 = vmatprep.subr.bf16.mxu0 0
        %528 = vmatpush2.bf16.msra.mxu0 0
        %529 = vmatprep.subr.bf16.mxu0 0
        %530 = vmatpush2.bf16.msra.mxu0 0
        %531 = vmatprep.subr.bf16.mxu0 0
        %532 = vmatpush2.bf16.msra.mxu0 0
        %533 = vmatprep.mubr.bf16.mxu0 0
        %534 = vmatmul.mubr.bf16.gmra.mxu0 %v495
        %v535 = vpop.f32.mrf.mxu0
        %v536 = vadd.f32 %v482, %v535
        %v537 = vpop.f32.mrf.mxu0
        %v538 = vpop.f32.mrf.mxu0
        %v539 = vpop.f32.mrf.mxu0
        %540 = vdwg.mxu0
        %v541 = vpack.c.bf16 %v471, %v468
        %v542 = vpack.c.bf16 %v536, %v536
        %vm543 = vcmask 261120
        %v545 = vsel %vm543, %v541, 0
        %v548 = vsel %vm543, %v542, 0
        %550 = vmatprep.subr.bf16.mxu0 0
        %551 = vmatpush1.bf16.xpose.msra.mxu0 0
        %552 = vmatprep.subr.bf16.mxu0 0
        %553 = vmatpush1.bf16.xpose.msra.mxu0 0
        %554 = vmatprep.subr.bf16.mxu0 0
        %555 = vmatpush1.bf16.xpose.msra.mxu0 0
        %556 = vmatprep.subr.bf16.mxu0 0
        %557 = vmatpush1.bf16.xpose.msra.mxu0 0
        %558 = vmatprep.subr.bf16.mxu0 0
        %559 = vmatpush1.bf16.xpose.msra.mxu0 0
        %560 = vmatprep.subr.bf16.mxu0 0
        %561 = vmatpush1.bf16.xpose.msra.mxu0 0
        %562 = vmatprep.subr.bf16.mxu0 0
        %563 = vmatpush1.bf16.xpose.msra.mxu0 0
        %564 = vmatprep.subr.bf16.mxu0 0
        %565 = vmatpush1.bf16.xpose.msra.mxu0 %v548
        %566 = vmatprep.subr.bf16.mxu0 0
        %567 = vmatpush2.bf16.xpose.msra.mxu0 0
        %568 = vmatprep.subr.bf16.mxu0 0
        %569 = vmatpush2.bf16.xpose.msra.mxu0 0
        %570 = vmatprep.subr.bf16.mxu0 0
        %571 = vmatpush2.bf16.xpose.msra.mxu0 0
        %572 = vmatprep.subr.bf16.mxu0 0
        %573 = vmatpush2.bf16.xpose.msra.mxu0 0
        %574 = vmatprep.subr.bf16.mxu0 0
        %575 = vmatpush2.bf16.xpose.msra.mxu0 0
        %576 = vmatprep.subr.bf16.mxu0 0
        %577 = vmatpush2.bf16.xpose.msra.mxu0 0
        %578 = vmatprep.subr.bf16.mxu0 0
        %579 = vmatpush2.bf16.xpose.msra.mxu0 0
        %580 = vmatprep.subr.bf16.mxu0 0
        %581 = vmatpush2.bf16.xpose.msra.mxu0 0
        %582 = vmatprep.mubr.bf16.mxu0 0
        %583 = vmatmul.mubr.bf16.gmra.mxu0 %v545
        %v584 = vpop.f32.mrf.mxu0
        %v585 = vadd.f32 0.0, %v584
        %v586 = vpop.f32.mrf.mxu0
        %v587 = vpop.f32.mrf.mxu0
        %v588 = vadd.f32 0.0, %v587
        %v589 = vpop.f32.mrf.mxu0
        %590 = vdwg.mxu0
        %vm591 = vcmask 64512
        %v592 = vsel %vm591, %v585, -inf
        %593 = vmax.xlane.f32.xlu0 %v592
        %v594 = vpop.xlane.xlu0 %593
        %v595 = vsel %vm591, %v588, -inf
        %596 = vmax.xlane.f32.xlu0 %v595
        %v597 = vpop.xlane.xlu0 %596
        %v598 = vsub.f32 %v585, %v594
        %v599 = vsub.f32 %v588, %v597
        %v600 = vmul.f32 %v598, 1.442695
        %v601 = vpow.pop %v600
        %v602 = vmul.f32 %v599, 1.442695
        %v603 = vpow.pop %v602
        %v604 = vsel %vm591, %v601, 0.0
        %605 = vadd.xlane.f32.xlu0 %v604
        %v606 = vpop.xlane.xlu0 %605
        %v607 = vsel %vm591, %v603, 0.0
        %608 = vadd.xlane.f32.xlu0 %v607
        %v609 = vpop.xlane.xlu0 %608
        %v610 = vrcp.pop %v606
        %v611 = vmul.f32 1.0, %v610
        %v612 = vrcp.pop %v609
        %v613 = vmul.f32 1.0, %v612
        %v614 = vmul.f32 %v601, %v611
        %v615 = vmul.f32 %v603, %v613
        %v616 = vpack.c.bf16 %v615, %v614
        %618 = vrot.lane.b32.xlu0 %v542, 96
        %v619 = vpop.permute.xlu0 %618
        %v621 = vsel %vm591, %v616, 0
        %v624 = vsel %vm497, %v619, 0
        %626 = vmatprep.subr.bf16.mxu0 0
        %627 = vmatpush1.bf16.msra.mxu0 0
        %628 = vmatprep.subr.bf16.mxu0 0
        %629 = vmatpush1.bf16.msra.mxu0 0
        %630 = vmatprep.subr.bf16.mxu0 0
        %631 = vmatpush1.bf16.msra.mxu0 0
        %632 = vmatprep.subr.bf16.mxu0 0
        %633 = vmatpush1.bf16.msra.mxu0 0
        %634 = vmatprep.subr.bf16.mxu0 0
        %635 = vmatpush1.bf16.msra.mxu0 0
        %636 = vmatprep.subr.bf16.mxu0 0
        %637 = vmatpush1.bf16.msra.mxu0 0
        %638 = vmatprep.subr.bf16.mxu0 0
        %639 = vmatpush1.bf16.msra.mxu0 0
        %640 = vmatprep.subr.bf16.mxu0 0
        %641 = vmatpush1.bf16.msra.mxu0 %v624
        %642 = vmatprep.subr.bf16.mxu0 0
        %643 = vmatpush2.bf16.msra.mxu0 0
        %644 = vmatprep.subr.bf16.mxu0 0
        %645 = vmatpush2.bf16.msra.mxu0 0
        %646 = vmatprep.subr.bf16.mxu0 0
        %647 = vmatpush2.bf16.msra.mxu0 0
        %648 = vmatprep.subr.bf16.mxu0 0
        %649 = vmatpush2.bf16.msra.mxu0 0
        %650 = vmatprep.subr.bf16.mxu0 0
        %651 = vmatpush2.bf16.msra.mxu0 0
        %652 = vmatprep.subr.bf16.mxu0 0
        %653 = vmatpush2.bf16.msra.mxu0 0
        %654 = vmatprep.subr.bf16.mxu0 0
        %655 = vmatpush2.bf16.msra.mxu0 0
        %656 = vmatprep.subr.bf16.mxu0 0
        %657 = vmatpush2.bf16.msra.mxu0 0
        %658 = vmatprep.mubr.bf16.mxu0 0
        %659 = vmatmul.mubr.bf16.gmra.mxu0 %v621
        %v660 = vpop.f32.mrf.mxu0
        %v661 = vadd.f32 0.0, %v660
        %v662 = vpop.f32.mrf.mxu0
        %v663 = vpop.f32.mrf.mxu0
        %v664 = vadd.f32 0.0, %v663
        %v665 = vpop.f32.mrf.mxu0
        %666 = vdwg.mxu0
        %v667 = vpack.c.bf16 %v664, %v661
        %v668 = vld [vmem:[%s6] sm:$0xf]
        %v669 = vld [vmem:[%s6 + $0x4] sm:$0xf]
        %v670 = vld [vmem:[%s6 + $0x8] sm:$0xf]
        %v671 = vld [vmem:[%s6 + $0xc] sm:$0xf]
        %v672 = vld [vmem:[%s7] sm:$0x1]
        %v674 = vlaneseq
        %v675 = vshrl.u32 %v674, 7
        %v676 = vsub.s32 0, %v675
        %v677 = vrot.slane %v672, %v676
        %v683 = vunpack.c.l.b16 %v668
        %v684 = vunpack.c.l.b16 %v669
        %v685 = vunpack.c.l.b16 %v670
        %v686 = vunpack.c.l.b16 %v671
        %v687 = vpack.c.b16 %v684, %v683
        %v688 = vpack.c.b16 %v686, %v685
        %v692 = vsel %vm543, %v667, 0
        %694 = vmatprep.subr.bf16.mxu0 0
        %695 = vmatpush1.bf16.msra.mxu0 0
        %696 = vmatprep.subr.bf16.mxu0 0
        %697 = vmatpush1.bf16.msra.mxu0 0
        %698 = vmatprep.subr.bf16.mxu0 0
        %699 = vmatpush1.bf16.msra.mxu0 0
        %700 = vmatprep.subr.bf16.mxu0 0
        %701 = vmatpush1.bf16.msra.mxu0 0
        %702 = vmatprep.subr.bf16.mxu0 0
        %703 = vmatpush1.bf16.msra.mxu0 0
        %704 = vmatprep.subr.bf16.mxu0 0
        %705 = vmatpush1.bf16.msra.mxu0 0
        %706 = vmatprep.subr.bf16.mxu0 0
        %707 = vmatpush1.bf16.msra.mxu0 %v688
        %708 = vmatprep.subr.bf16.mxu0 0
        %709 = vmatpush1.bf16.msra.mxu0 %v687
        %710 = vmatprep.subr.bf16.mxu0 0
        %711 = vmatpush2.bf16.msra.mxu0 0
        %712 = vmatprep.subr.bf16.mxu0 0
        %713 = vmatpush2.bf16.msra.mxu0 0
        %714 = vmatprep.subr.bf16.mxu0 0
        %715 = vmatpush2.bf16.msra.mxu0 0
        %716 = vmatprep.subr.bf16.mxu0 0
        %717 = vmatpush2.bf16.msra.mxu0 0
        %718 = vmatprep.subr.bf16.mxu0 0
        %719 = vmatpush2.bf16.msra.mxu0 0
        %720 = vmatprep.subr.bf16.mxu0 0
        %721 = vmatpush2.bf16.msra.mxu0 0
        %722 = vmatprep.subr.bf16.mxu0 0
        %723 = vmatpush2.bf16.msra.mxu0 0
        %724 = vmatprep.subr.bf16.mxu0 0
        %725 = vmatpush2.bf16.msra.mxu0 0
        %726 = vmatprep.mubr.bf16.mxu0 0
        %727 = vmatmul.mubr.bf16.gmra.mxu0 %v692
        %v728 = vpop.f32.mrf.mxu0
        %v729 = vadd.f32 %v677, %v728
        %v730 = vpop.f32.mrf.mxu0
        %v731 = vpop.f32.mrf.mxu0
        %v732 = vadd.f32 %v677, %v731
        %v733 = vpop.f32.mrf.mxu0
        %734 = vdwg.mxu0
        %735 = vst.msk [vmem:[%s363] sm:$0xff] %vm543, %v729
        %736 = vst.msk [vmem:[%s363 + $0x8] sm:$0xff] %vm543, %v732
        %737 = vst.msk [vmem:[%s380] sm:$0xff] %vm591, %v614
        %738 = vst.msk [vmem:[%s380 + $0x8] sm:$0xff] %vm591, %v615
        %s739 = sand.u32 %s213, 1
        %s740 = scalar_lea.sflag [#allocation4], %s739
        %s741 = sand.u32 %s213, 1
        %s742 = smul.addr %s741, 16
        %s743 = scalar_lea.vmem [#allocation5], %s742
        %p744 = scmp.lt.s32.totalorder %s27, 1
        %s745 = scalar_select %p744, %s27, 1
        %s746 = smul.addr %s745, 2
        %s747 = smul.addr %s746, 8
        %s748 = scalar_lea.vmem %s9, %s747
        // Predicated region
        $region57: #{tpu_custom_call.1} parent=51 // pred_check
          %p749 = pneg %p223
        $region58: #{tpu_custom_call.1} parent=51 // pred_check_branch
          %751 = sbr.rel (%p749) target = $region60
        $region59: #{tpu_custom_call.1} parent=51 // pred_region
          %s753 = ssub.s32 256, 256
          %754 = vsyncadd %s740, %s753
          %s755 = smul.addr %s27, 2
          %s756 = smul.addr %s755, 128
          %s757 = scalar_lea.hbm %s8, %s756
          %s758 = sshll.u32 %s743, 4
          %s759 = int_to_ptr.vmem [resolvable:$true] %s758
          %764 = dma.vmem_to_hbm [thread:$0]  %s759, 256, %s757, %s740, 128, 128, 8
        $region60: #{tpu_custom_call.1} parent=51 // pred_fallthru
          _
        // Predicated region
        $region61: #{tpu_custom_call.1} parent=51 // pred_check
          %p765 = pneg %p249
        $region62: #{tpu_custom_call.1} parent=51 // pred_check_branch
          %767 = sbr.rel (%p765) target = $region64
        $region63: #{tpu_custom_call.1} parent=51 // pred_region
          _
        $region64: #{tpu_custom_call.1} parent=51 // pred_fallthru
          _
      $region52: #{tpu_custom_call.1} parent=5 // pred_fallthru
        _
      %p768 = scmp.le.s32.totalorder 2, %s22
      // Predicated region
      $region65: #{tpu_custom_call.1} parent=5 // pred_check
        %p769 = pneg %p768
      $region66: #{tpu_custom_call.1} parent=5 // pred_check_branch
        %771 = sbr.rel (%p769) target = $region68
      $region67: #{tpu_custom_call.1} parent=5 // pred_region
        %s772 = ssub.s32 %s22, 2
        // Predicated region
        $region69: #{tpu_custom_call.1} parent=67 // pred_check
          %p773 = pneg %p229
        $region70: #{tpu_custom_call.1} parent=67 // pred_check_branch
          %775 = sbr.rel (%p773) target = $region72
        $region71: #{tpu_custom_call.1} parent=67 // pred_region
          %s776 = sand.u32 %s214, 1
          %s777 = scalar_lea.sflag [#allocation4], %s776
          %s778 = sand.u32 %s214, 1
          %s779 = smul.addr %s778, 16
          %s780 = scalar_lea.vmem [#allocation5], %s779
          %781 = dma.done %s777, 256
        $region72: #{tpu_custom_call.1} parent=67 // pred_fallthru
          _
        // Predicated region
        $region73: #{tpu_custom_call.1} parent=67 // pred_check
          %p782 = pneg %p255
        $region74: #{tpu_custom_call.1} parent=67 // pred_check_branch
          %784 = sbr.rel (%p782) target = $region76
        $region75: #{tpu_custom_call.1} parent=67 // pred_region
          %p785 = scmp.lt.s32.totalorder %s28, 1
          %s786 = scalar_select %p785, %s28, 1
          %s787 = smul.addr %s786, 2
          %s788 = smul.addr %s787, 8
          %s789 = scalar_lea.vmem %s9, %s788
        $region76: #{tpu_custom_call.1} parent=67 // pred_fallthru
          _
      $region68: #{tpu_custom_call.1} parent=5 // pred_fallthru
        _
    $region6: #{tpu_custom_call.1} parent=1 // loop_footer
      %s26 = sadd.s32 1, %s22
    $region7: #{tpu_custom_call.1} parent=1 // loop_footer_branch
      %21 = sbr.rel target = $region3
    $region8: #{tpu_custom_call.1} parent=1 // loop_exit
      _
    %790 = vsyncpa [#allocation3], 1
    %s791 = scalar_lea.sflag [#allocation3], 1
    %792 = vsyncpa %s791, 1
    %793 = vsyncpa [#allocation4], 1
    %s794 = scalar_lea.sflag [#allocation4], 1
    %795 = vsyncpa %s794, 1

</llo_original>
